<compile_context>
chip_gen: v7x
topology: tpu7x:2x2x1
jax: 0.10.0
libtpu: 0.0.40
codegen_flags: <defaults>
</compile_context>

<pallas_src>
import functools

import numpy as np
import jax
import jax.numpy as jnp
from jax import lax
from jax.experimental import pallas as pl
from jax.experimental.pallas import tpu as pltpu

HP = 128      # lane-aligned per-gate stride
OUTP = 128    # lane-dense output width (column 0 is the real output)


def gru_linear_kernel(x_ref, wih_ref, whh_rz_ref, whh_n_ref, bgi_ref, bhn_ref,
                      wout_ref, bout_ref, out_ref, *, seq_len, batch):
    """GRU time recurrence + output projection, everything in VMEM.

    x_ref      : (S*B, HP)     zero-padded inputs (time-major rows), f32
    wih_ref    : (HP, 3*HP)    gate-aligned, zero-padded W_ih^T, f32
    whh_rz_ref : (HP, 2*HP)    r/z block of W_hh^T, bf16
    whh_n_ref  : (HP, HP)      n   block of W_hh^T, bf16
    bgi_ref    : (1, 3*HP)     folded biases [b_ir+b_hr | b_iz+b_hz | b_in], f32
    bhn_ref    : (1, HP)       n-gate hidden bias b_hn, f32
    wout_ref   : (HP, OUTP)    Linear weight (column 0 real, rest zero), f32
    bout_ref   : (1, OUTP)     Linear bias   (column 0 real, rest zero), f32
    out_ref    : (S*B, OUTP)   lane-dense output (column 0 is the result), f32
    """
    # Hoisted input projection for ALL timesteps — off the recurrence chain.
    gi = jnp.dot(x_ref[...], wih_ref[...],
                 preferred_element_type=jnp.float32) + bgi_ref[...]   # (S*B, 3*HP)

    bhn = bhn_ref[...]                                                # (1, HP)

    # Hidden state lives in vregs; padded lanes stay 0 by construction.
    h = jnp.zeros((batch, HP), jnp.float32)
    hs = []

    # Fully unrolled time loop (S is small and static) — gives the scheduler
    # cross-iteration visibility; all slices below use concrete offsets.
    for t in range(seq_len):
        gi_t = gi[t * batch:(t + 1) * batch, :]                       # (B, 3*HP)
        h_bf = h.astype(jnp.bfloat16)

        # Split recurrence matmul: r/z block first so their sigmoids can
        # overlap with the MXU producing the n block. Weights are read
        # straight from the (bf16) refs so they are not pinned in vregs.
        gh_rz = jnp.dot(h_bf, whh_rz_ref[...],
                        preferred_element_type=jnp.float32)           # (B, 2*HP)
        gh_n = jnp.dot(h_bf, whh_n_ref[...],
                       preferred_element_type=jnp.float32)            # (B, HP)

        # sigmoid(x) == 0.5*tanh(0.5*x) + 0.5 : one EUP op instead of exp+recip.
        r = 0.5 * jnp.tanh(0.5 * (gi_t[:, 0:HP] + gh_rz[:, 0:HP])) + 0.5
        z = 0.5 * jnp.tanh(0.5 * (gi_t[:, HP:2 * HP] + gh_rz[:, HP:2 * HP])) + 0.5
        n = jnp.tanh(gi_t[:, 2 * HP:3 * HP] + r * (gh_n + bhn))
        h = (1.0 - z) * n + z * h
        hs.append(h)

    # Per-step hidden outputs stay in registers; one concatenate, then a
    # single lane-dense matmul and an unmasked (S*B, 128) store.
    rout = jnp.concatenate(hs, axis=0)                                # (S*B, HP)
    out_ref[...] = (jnp.dot(rout, wout_ref[...],
                            preferred_element_type=jnp.float32)
                    + bout_ref[...]).astype(out_ref.dtype)


def make_rnn_forward(w_ih, w_hh, b_ih, b_hh, w_out, b_out, *, seq_len, batch):
    """One-time weight layout prep (numpy, no per-call XLA ops); returns a
    jitted forward whose per-call path is: pad x -> pallas kernel -> slice."""
    w_ih = np.asarray(w_ih, np.float32)     # (3H, I)
    w_hh = np.asarray(w_hh, np.float32)     # (3H, H)
    b_ih = np.asarray(b_ih, np.float32)     # (3H,)
    b_hh = np.asarray(b_hh, np.float32)     # (3H,)
    w_out = np.asarray(w_out, np.float32)   # (1, H)
    b_out = np.asarray(b_out, np.float32)   # (1,)
    H = w_hh.shape[1]
    I = w_ih.shape[1]
    assert H <= HP and I <= HP

    def pad_gates(w_t):                     # (K, 3H) -> (HP, 3*HP), gate g at lanes g*HP..
        K = w_t.shape[0]
        out = np.zeros((HP, 3 * HP), np.float32)
        for g in range(3):
            out[:K, g * HP:g * HP + H] = w_t[:, g * H:(g + 1) * H]
        return out

    wih_p = jnp.asarray(pad_gates(w_ih.T))                                 # f32
    whh_full = pad_gates(w_hh.T)
    whh_rz = jnp.asarray(whh_full[:, :2 * HP]).astype(jnp.bfloat16)        # bf16
    whh_n = jnp.asarray(whh_full[:, 2 * HP:]).astype(jnp.bfloat16)         # bf16

    # Fold r/z biases (ih+hh) and the n-gate ih bias into GI; n-gate hh bias
    # is applied inside the loop (inside the r * (...) term).
    bgi_np = np.zeros((1, 3 * HP), np.float32)
    bgi_np[0, 0:H] = b_ih[0:H] + b_hh[0:H]                        # r
    bgi_np[0, HP:HP + H] = b_ih[H:2 * H] + b_hh[H:2 * H]          # z
    bgi_np[0, 2 * HP:2 * HP + H] = b_ih[2 * H:3 * H]              # n (ih part)
    bgi = jnp.asarray(bgi_np)
    bhn_np = np.zeros((1, HP), np.float32)
    bhn_np[0, :H] = b_hh[2 * H:3 * H]                             # n (hh part)
    bhn = jnp.asarray(bhn_np)

    wout_np = np.zeros((HP, OUTP), np.float32)
    wout_np[:H, 0] = w_out.reshape(-1)
    wout_p = jnp.asarray(wout_np)
    bout_np = np.zeros((1, OUTP), np.float32)
    bout_np[0, 0] = b_out.reshape(-1)[0]
    bout_p = jnp.asarray(bout_np)

    kernel = functools.partial(gru_linear_kernel, seq_len=seq_len, batch=batch)
    pallas_fn = pl.pallas_call(
        kernel,
        out_shape=jax.ShapeDtypeStruct((seq_len * batch, OUTP), jnp.float32),
        in_specs=[pl.BlockSpec(memory_space=pltpu.MemorySpace.VMEM)] * 8,
        out_specs=pl.BlockSpec(memory_space=pltpu.MemorySpace.VMEM),
    )

    @jax.jit
    def fwd(x):
        S, B, Ix = x.shape
        x2 = x.reshape(S * B, Ix).astype(jnp.float32)
        x_p = jnp.pad(x2, ((0, 0), (0, HP - Ix)))                 # (S*B, HP)
        out_wide = pallas_fn(x_p, wih_p, whh_rz, whh_n, bgi, bhn, wout_p, bout_p)
        return out_wide[:, :1].reshape(S, B, 1).astype(x.dtype)

    return fwd


def rnn_forward_ref(x, w_ih, w_hh, b_ih, b_hh, w_out, b_out):
    """Pure-JAX reference matching PyTorch GRU + Linear semantics."""
    H = w_hh.shape[1]

    def step(h, x_t):
        gi = x_t @ w_ih.T + b_ih
        gh = h @ w_hh.T + b_hh
        r = jax.nn.sigmoid(gi[:, :H] + gh[:, :H])
        z = jax.nn.sigmoid(gi[:, H:2 * H] + gh[:, H:2 * H])
        n = jnp.tanh(gi[:, 2 * H:] + r * gh[:, 2 * H:])
        h_new = (1.0 - z) * n + z * h
        return h_new, h_new

    h0 = jnp.zeros((x.shape[1], H), x.dtype)
    _, r_out = lax.scan(step, h0, x)
    return r_out @ w_out.T + b_out


if __name__ == "__main__":
    SEQ, BATCH, IN_SIZE, HID = 8, 2, 19, 19

    key = jax.random.PRNGKey(0)
    ks = jax.random.split(key, 7)
    k_gru = 1.0 / jnp.sqrt(HID)     # PyTorch GRU init scale
    k_lin = 1.0 / jnp.sqrt(HID)     # PyTorch Linear init scale

    x = jax.random.normal(ks[0], (SEQ, BATCH, IN_SIZE), jnp.float32)
    w_ih = jax.random.uniform(ks[1], (3 * HID, IN_SIZE), jnp.float32, -k_gru, k_gru)
    w_hh = jax.random.uniform(ks[2], (3 * HID, HID), jnp.float32, -k_gru, k_gru)
    b_ih = jax.random.uniform(ks[3], (3 * HID,), jnp.float32, -k_gru, k_gru)
    b_hh = jax.random.uniform(ks[4], (3 * HID,), jnp.float32, -k_gru, k_gru)
    w_out = jax.random.uniform(ks[5], (1, HID), jnp.float32, -k_lin, k_lin)
    b_out = jax.random.uniform(ks[6], (1,), jnp.float32, -k_lin, k_lin)

    fwd = make_rnn_forward(w_ih, w_hh, b_ih, b_hh, w_out, b_out,
                           seq_len=SEQ, batch=BATCH)
    out = jax.block_until_ready(fwd(x))

    ref = rnn_forward_ref(x, w_ih, w_hh, b_ih, b_hh, w_out, b_out)
    assert out.shape == (SEQ, BATCH, 1), out.shape
    max_err = jnp.max(jnp.abs(out - ref))
    # Tolerance loosened vs the pure-f32 version because the recurrence matmul
    # operands are bf16 (MXU-native); all VPU/EUP math stays f32.
    assert jnp.allclose(out, ref, atol=2e-2, rtol=2e-2), \
        f"max abs err = {max_err}"

    print("KERNEL_OK")
</pallas_src>

<mosaic_0001>
module attributes {stable_mosaic.version = 11 : i64} {
  func.func @gru_linear_kernel(%arg0: memref<16x128xf32, #tpu.memory_space<vmem>>, %arg1: memref<128x384xf32, #tpu.memory_space<vmem>>, %arg2: memref<128x256xbf16, #tpu.memory_space<vmem>>, %arg3: memref<128x128xbf16, #tpu.memory_space<vmem>>, %arg4: memref<1x384xf32, #tpu.memory_space<vmem>>, %arg5: memref<1x128xf32, #tpu.memory_space<vmem>>, %arg6: memref<128x128xf32, #tpu.memory_space<vmem>>, %arg7: memref<1x128xf32, #tpu.memory_space<vmem>>, %arg8: memref<16x128xf32, #tpu.memory_space<vmem>>) attributes {dimension_semantics = [], scalar_prefetch = 0 : i64, scratch_operands = 0 : i64, tpu.core_type = #tpu.core_type<tc>} {
    %c0 = arith.constant 0 : index
    %c0_0 = arith.constant 0 : index
    %0 = vector.load %arg0[%c0, %c0_0] : memref<16x128xf32, #tpu.memory_space<vmem>>, vector<16x128xf32>
    %c0_1 = arith.constant 0 : index
    %c0_2 = arith.constant 0 : index
    %1 = vector.load %arg1[%c0_1, %c0_2] : memref<128x384xf32, #tpu.memory_space<vmem>>, vector<128x384xf32>
    %cst = arith.constant dense<0.000000e+00> : vector<16x384xf32>
    %2 = tpu.matmul %0, %1, %cst {dimension_numbers = #tpu.dot_dimension_numbers<[1], [0], [0], [1], [0, 0, 1, 1], [], []>} : vector<16x128xf32>, vector<128x384xf32>, vector<16x384xf32> -> vector<16x384xf32>
    %c0_3 = arith.constant 0 : index
    %c0_4 = arith.constant 0 : index
    %3 = vector.load %arg4[%c0_3, %c0_4] : memref<1x384xf32, #tpu.memory_space<vmem>>, vector<1x384xf32>
    %4 = vector.broadcast %3 : vector<1x384xf32> to vector<16x384xf32>
    %5 = arith.addf %2, %4 : vector<16x384xf32>
    %c0_5 = arith.constant 0 : index
    %c0_6 = arith.constant 0 : index
    %6 = vector.load %arg5[%c0_5, %c0_6] : memref<1x128xf32, #tpu.memory_space<vmem>>, vector<1x128xf32>
    %cst_7 = arith.constant 0.000000e+00 : f32
    %7 = vector.broadcast %cst_7 : f32 to vector<2x128xf32>
    %8 = vector.extract_strided_slice %5 {offsets = [0, 0], sizes = [2, 384], strides = [1, 1]} : vector<16x384xf32> to vector<2x384xf32>
    %9 = arith.truncf %7 : vector<2x128xf32> to vector<2x128xbf16>
    %c0_8 = arith.constant 0 : index
    %c0_9 = arith.constant 0 : index
    %10 = vector.load %arg2[%c0_8, %c0_9] : memref<128x256xbf16, #tpu.memory_space<vmem>>, vector<128x256xbf16>
    %cst_10 = arith.constant dense<0.000000e+00> : vector<2x256xf32>
    %11 = tpu.matmul %9, %10, %cst_10 {dimension_numbers = #tpu.dot_dimension_numbers<[1], [0], [0], [1], [0, 0, 1, 1], [], []>} : vector<2x128xbf16>, vector<128x256xbf16>, vector<2x256xf32> -> vector<2x256xf32>
    %c0_11 = arith.constant 0 : index
    %c0_12 = arith.constant 0 : index
    %12 = vector.load %arg3[%c0_11, %c0_12] : memref<128x128xbf16, #tpu.memory_space<vmem>>, vector<128x128xbf16>
    %cst_13 = arith.constant dense<0.000000e+00> : vector<2x128xf32>
    %13 = tpu.matmul %9, %12, %cst_13 {dimension_numbers = #tpu.dot_dimension_numbers<[1], [0], [0], [1], [0, 0, 1, 1], [], []>} : vector<2x128xbf16>, vector<128x128xbf16>, vector<2x128xf32> -> vector<2x128xf32>
    %14 = vector.extract_strided_slice %8 {offsets = [0, 0], sizes = [2, 128], strides = [1, 1]} : vector<2x384xf32> to vector<2x128xf32>
    %15 = vector.extract_strided_slice %11 {offsets = [0, 0], sizes = [2, 128], strides = [1, 1]} : vector<2x256xf32> to vector<2x128xf32>
    %16 = arith.addf %14, %15 : vector<2x128xf32>
    %cst_14 = arith.constant 5.000000e-01 : f32
    %17 = vector.broadcast %cst_14 : f32 to vector<2x128xf32>
    %18 = arith.mulf %17, %16 : vector<2x128xf32>
    %19 = math.tanh %18 : vector<2x128xf32>
    %cst_15 = arith.constant 5.000000e-01 : f32
    %20 = vector.broadcast %cst_15 : f32 to vector<2x128xf32>
    %21 = arith.mulf %20, %19 : vector<2x128xf32>
    %cst_16 = arith.constant 5.000000e-01 : f32
    %22 = vector.broadcast %cst_16 : f32 to vector<2x128xf32>
    %23 = arith.addf %21, %22 : vector<2x128xf32>
    %24 = vector.extract_strided_slice %8 {offsets = [0, 128], sizes = [2, 128], strides = [1, 1]} : vector<2x384xf32> to vector<2x128xf32>
    %25 = vector.extract_strided_slice %11 {offsets = [0, 128], sizes = [2, 128], strides = [1, 1]} : vector<2x256xf32> to vector<2x128xf32>
    %26 = arith.addf %24, %25 : vector<2x128xf32>
    %cst_17 = arith.constant 5.000000e-01 : f32
    %27 = vector.broadcast %cst_17 : f32 to vector<2x128xf32>
    %28 = arith.mulf %27, %26 : vector<2x128xf32>
    %29 = math.tanh %28 : vector<2x128xf32>
    %cst_18 = arith.constant 5.000000e-01 : f32
    %30 = vector.broadcast %cst_18 : f32 to vector<2x128xf32>
    %31 = arith.mulf %30, %29 : vector<2x128xf32>
    %cst_19 = arith.constant 5.000000e-01 : f32
    %32 = vector.broadcast %cst_19 : f32 to vector<2x128xf32>
    %33 = arith.addf %31, %32 : vector<2x128xf32>
    %34 = vector.extract_strided_slice %8 {offsets = [0, 256], sizes = [2, 128], strides = [1, 1]} : vector<2x384xf32> to vector<2x128xf32>
    %35 = vector.broadcast %6 : vector<1x128xf32> to vector<2x128xf32>
    %36 = arith.addf %13, %35 : vector<2x128xf32>
    %37 = arith.mulf %23, %36 : vector<2x128xf32>
    %38 = arith.addf %34, %37 : vector<2x128xf32>
    %39 = math.tanh %38 : vector<2x128xf32>
    %cst_20 = arith.constant 1.000000e+00 : f32
    %40 = vector.broadcast %cst_20 : f32 to vector<2x128xf32>
    %41 = arith.subf %40, %33 : vector<2x128xf32>
    %42 = arith.mulf %41, %39 : vector<2x128xf32>
    %43 = arith.mulf %33, %7 : vector<2x128xf32>
    %44 = arith.addf %42, %43 : vector<2x128xf32>
    %45 = vector.extract_strided_slice %5 {offsets = [2, 0], sizes = [2, 384], strides = [1, 1]} : vector<16x384xf32> to vector<2x384xf32>
    %46 = arith.truncf %44 : vector<2x128xf32> to vector<2x128xbf16>
    %c0_21 = arith.constant 0 : index
    %c0_22 = arith.constant 0 : index
    %47 = vector.load %arg2[%c0_21, %c0_22] : memref<128x256xbf16, #tpu.memory_space<vmem>>, vector<128x256xbf16>
    %cst_23 = arith.constant dense<0.000000e+00> : vector<2x256xf32>
    %48 = tpu.matmul %46, %47, %cst_23 {dimension_numbers = #tpu.dot_dimension_numbers<[1], [0], [0], [1], [0, 0, 1, 1], [], []>} : vector<2x128xbf16>, vector<128x256xbf16>, vector<2x256xf32> -> vector<2x256xf32>
    %c0_24 = arith.constant 0 : index
    %c0_25 = arith.constant 0 : index
    %49 = vector.load %arg3[%c0_24, %c0_25] : memref<128x128xbf16, #tpu.memory_space<vmem>>, vector<128x128xbf16>
    %cst_26 = arith.constant dense<0.000000e+00> : vector<2x128xf32>
    %50 = tpu.matmul %46, %49, %cst_26 {dimension_numbers = #tpu.dot_dimension_numbers<[1], [0], [0], [1], [0, 0, 1, 1], [], []>} : vector<2x128xbf16>, vector<128x128xbf16>, vector<2x128xf32> -> vector<2x128xf32>
    %51 = vector.extract_strided_slice %45 {offsets = [0, 0], sizes = [2, 128], strides = [1, 1]} : vector<2x384xf32> to vector<2x128xf32>
    %52 = vector.extract_strided_slice %48 {offsets = [0, 0], sizes = [2, 128], strides = [1, 1]} : vector<2x256xf32> to vector<2x128xf32>
    %53 = arith.addf %51, %52 : vector<2x128xf32>
    %cst_27 = arith.constant 5.000000e-01 : f32
    %54 = vector.broadcast %cst_27 : f32 to vector<2x128xf32>
    %55 = arith.mulf %54, %53 : vector<2x128xf32>
    %56 = math.tanh %55 : vector<2x128xf32>
    %cst_28 = arith.constant 5.000000e-01 : f32
    %57 = vector.broadcast %cst_28 : f32 to vector<2x128xf32>
    %58 = arith.mulf %57, %56 : vector<2x128xf32>
    %cst_29 = arith.constant 5.000000e-01 : f32
    %59 = vector.broadcast %cst_29 : f32 to vector<2x128xf32>
    %60 = arith.addf %58, %59 : vector<2x128xf32>
    %61 = vector.extract_strided_slice %45 {offsets = [0, 128], sizes = [2, 128], strides = [1, 1]} : vector<2x384xf32> to vector<2x128xf32>
    %62 = vector.extract_strided_slice %48 {offsets = [0, 128], sizes = [2, 128], strides = [1, 1]} : vector<2x256xf32> to vector<2x128xf32>
    %63 = arith.addf %61, %62 : vector<2x128xf32>
    %cst_30 = arith.constant 5.000000e-01 : f32
    %64 = vector.broadcast %cst_30 : f32 to vector<2x128xf32>
    %65 = arith.mulf %64, %63 : vector<2x128xf32>
    %66 = math.tanh %65 : vector<2x128xf32>
    %cst_31 = arith.constant 5.000000e-01 : f32
    %67 = vector.broadcast %cst_31 : f32 to vector<2x128xf32>
    %68 = arith.mulf %67, %66 : vector<2x128xf32>
    %cst_32 = arith.constant 5.000000e-01 : f32
    %69 = vector.broadcast %cst_32 : f32 to vector<2x128xf32>
    %70 = arith.addf %68, %69 : vector<2x128xf32>
    %71 = vector.extract_strided_slice %45 {offsets = [0, 256], sizes = [2, 128], strides = [1, 1]} : vector<2x384xf32> to vector<2x128xf32>
    %72 = vector.broadcast %6 : vector<1x128xf32> to vector<2x128xf32>
    %73 = arith.addf %50, %72 : vector<2x128xf32>
    %74 = arith.mulf %60, %73 : vector<2x128xf32>
    %75 = arith.addf %71, %74 : vector<2x128xf32>
    %76 = math.tanh %75 : vector<2x128xf32>
    %cst_33 = arith.constant 1.000000e+00 : f32
    %77 = vector.broadcast %cst_33 : f32 to vector<2x128xf32>
    %78 = arith.subf %77, %70 : vector<2x128xf32>
    %79 = arith.mulf %78, %76 : vector<2x128xf32>
    %80 = arith.mulf %70, %44 : vector<2x128xf32>
    %81 = arith.addf %79, %80 : vector<2x128xf32>
    %82 = vector.extract_strided_slice %5 {offsets = [4, 0], sizes = [2, 384], strides = [1, 1]} : vector<16x384xf32> to vector<2x384xf32>
    %83 = arith.truncf %81 : vector<2x128xf32> to vector<2x128xbf16>
    %c0_34 = arith.constant 0 : index
    %c0_35 = arith.constant 0 : index
    %84 = vector.load %arg2[%c0_34, %c0_35] : memref<128x256xbf16, #tpu.memory_space<vmem>>, vector<128x256xbf16>
    %cst_36 = arith.constant dense<0.000000e+00> : vector<2x256xf32>
    %85 = tpu.matmul %83, %84, %cst_36 {dimension_numbers = #tpu.dot_dimension_numbers<[1], [0], [0], [1], [0, 0, 1, 1], [], []>} : vector<2x128xbf16>, vector<128x256xbf16>, vector<2x256xf32> -> vector<2x256xf32>
    %c0_37 = arith.constant 0 : index
    %c0_38 = arith.constant 0 : index
    %86 = vector.load %arg3[%c0_37, %c0_38] : memref<128x128xbf16, #tpu.memory_space<vmem>>, vector<128x128xbf16>
    %cst_39 = arith.constant dense<0.000000e+00> : vector<2x128xf32>
    %87 = tpu.matmul %83, %86, %cst_39 {dimension_numbers = #tpu.dot_dimension_numbers<[1], [0], [0], [1], [0, 0, 1, 1], [], []>} : vector<2x128xbf16>, vector<128x128xbf16>, vector<2x128xf32> -> vector<2x128xf32>
    %88 = vector.extract_strided_slice %82 {offsets = [0, 0], sizes = [2, 128], strides = [1, 1]} : vector<2x384xf32> to vector<2x128xf32>
    %89 = vector.extract_strided_slice %85 {offsets = [0, 0], sizes = [2, 128], strides = [1, 1]} : vector<2x256xf32> to vector<2x128xf32>
    %90 = arith.addf %88, %89 : vector<2x128xf32>
    %cst_40 = arith.constant 5.000000e-01 : f32
    %91 = vector.broadcast %cst_40 : f32 to vector<2x128xf32>
    %92 = arith.mulf %91, %90 : vector<2x128xf32>
    %93 = math.tanh %92 : vector<2x128xf32>
    %cst_41 = arith.constant 5.000000e-01 : f32
    %94 = vector.broadcast %cst_41 : f32 to vector<2x128xf32>
    %95 = arith.mulf %94, %93 : vector<2x128xf32>
    %cst_42 = arith.constant 5.000000e-01 : f32
    %96 = vector.broadcast %cst_42 : f32 to vector<2x128xf32>
    %97 = arith.addf %95, %96 : vector<2x128xf32>
    %98 = vector.extract_strided_slice %82 {offsets = [0, 128], sizes = [2, 128], strides = [1, 1]} : vector<2x384xf32> to vector<2x128xf32>
    %99 = vector.extract_strided_slice %85 {offsets = [0, 128], sizes = [2, 128], strides = [1, 1]} : vector<2x256xf32> to vector<2x128xf32>
    %100 = arith.addf %98, %99 : vector<2x128xf32>
    %cst_43 = arith.constant 5.000000e-01 : f32
    %101 = vector.broadcast %cst_43 : f32 to vector<2x128xf32>
    %102 = arith.mulf %101, %100 : vector<2x128xf32>
    %103 = math.tanh %102 : vector<2x128xf32>
    %cst_44 = arith.constant 5.000000e-01 : f32
    %104 = vector.broadcast %cst_44 : f32 to vector<2x128xf32>
    %105 = arith.mulf %104, %103 : vector<2x128xf32>
    %cst_45 = arith.constant 5.000000e-01 : f32
    %106 = vector.broadcast %cst_45 : f32 to vector<2x128xf32>
    %107 = arith.addf %105, %106 : vector<2x128xf32>
    %108 = vector.extract_strided_slice %82 {offsets = [0, 256], sizes = [2, 128], strides = [1, 1]} : vector<2x384xf32> to vector<2x128xf32>
    %109 = vector.broadcast %6 : vector<1x128xf32> to vector<2x128xf32>
    %110 = arith.addf %87, %109 : vector<2x128xf32>
    %111 = arith.mulf %97, %110 : vector<2x128xf32>
    %112 = arith.addf %108, %111 : vector<2x128xf32>
    %113 = math.tanh %112 : vector<2x128xf32>
    %cst_46 = arith.constant 1.000000e+00 : f32
    %114 = vector.broadcast %cst_46 : f32 to vector<2x128xf32>
    %115 = arith.subf %114, %107 : vector<2x128xf32>
    %116 = arith.mulf %115, %113 : vector<2x128xf32>
    %117 = arith.mulf %107, %81 : vector<2x128xf32>
    %118 = arith.addf %116, %117 : vector<2x128xf32>
    %119 = vector.extract_strided_slice %5 {offsets = [6, 0], sizes = [2, 384], strides = [1, 1]} : vector<16x384xf32> to vector<2x384xf32>
    %120 = arith.truncf %118 : vector<2x128xf32> to vector<2x128xbf16>
    %c0_47 = arith.constant 0 : index
    %c0_48 = arith.constant 0 : index
    %121 = vector.load %arg2[%c0_47, %c0_48] : memref<128x256xbf16, #tpu.memory_space<vmem>>, vector<128x256xbf16>
    %cst_49 = arith.constant dense<0.000000e+00> : vector<2x256xf32>
    %122 = tpu.matmul %120, %121, %cst_49 {dimension_numbers = #tpu.dot_dimension_numbers<[1], [0], [0], [1], [0, 0, 1, 1], [], []>} : vector<2x128xbf16>, vector<128x256xbf16>, vector<2x256xf32> -> vector<2x256xf32>
    %c0_50 = arith.constant 0 : index
    %c0_51 = arith.constant 0 : index
    %123 = vector.load %arg3[%c0_50, %c0_51] : memref<128x128xbf16, #tpu.memory_space<vmem>>, vector<128x128xbf16>
    %cst_52 = arith.constant dense<0.000000e+00> : vector<2x128xf32>
    %124 = tpu.matmul %120, %123, %cst_52 {dimension_numbers = #tpu.dot_dimension_numbers<[1], [0], [0], [1], [0, 0, 1, 1], [], []>} : vector<2x128xbf16>, vector<128x128xbf16>, vector<2x128xf32> -> vector<2x128xf32>
    %125 = vector.extract_strided_slice %119 {offsets = [0, 0], sizes = [2, 128], strides = [1, 1]} : vector<2x384xf32> to vector<2x128xf32>
    %126 = vector.extract_strided_slice %122 {offsets = [0, 0], sizes = [2, 128], strides = [1, 1]} : vector<2x256xf32> to vector<2x128xf32>
    %127 = arith.addf %125, %126 : vector<2x128xf32>
    %cst_53 = arith.constant 5.000000e-01 : f32
    %128 = vector.broadcast %cst_53 : f32 to vector<2x128xf32>
    %129 = arith.mulf %128, %127 : vector<2x128xf32>
    %130 = math.tanh %129 : vector<2x128xf32>
    %cst_54 = arith.constant 5.000000e-01 : f32
    %131 = vector.broadcast %cst_54 : f32 to vector<2x128xf32>
    %132 = arith.mulf %131, %130 : vector<2x128xf32>
    %cst_55 = arith.constant 5.000000e-01 : f32
    %133 = vector.broadcast %cst_55 : f32 to vector<2x128xf32>
    %134 = arith.addf %132, %133 : vector<2x128xf32>
    %135 = vector.extract_strided_slice %119 {offsets = [0, 128], sizes = [2, 128], strides = [1, 1]} : vector<2x384xf32> to vector<2x128xf32>
    %136 = vector.extract_strided_slice %122 {offsets = [0, 128], sizes = [2, 128], strides = [1, 1]} : vector<2x256xf32> to vector<2x128xf32>
    %137 = arith.addf %135, %136 : vector<2x128xf32>
    %cst_56 = arith.constant 5.000000e-01 : f32
    %138 = vector.broadcast %cst_56 : f32 to vector<2x128xf32>
    %139 = arith.mulf %138, %137 : vector<2x128xf32>
    %140 = math.tanh %139 : vector<2x128xf32>
    %cst_57 = arith.constant 5.000000e-01 : f32
    %141 = vector.broadcast %cst_57 : f32 to vector<2x128xf32>
    %142 = arith.mulf %141, %140 : vector<2x128xf32>
    %cst_58 = arith.constant 5.000000e-01 : f32
    %143 = vector.broadcast %cst_58 : f32 to vector<2x128xf32>
    %144 = arith.addf %142, %143 : vector<2x128xf32>
    %145 = vector.extract_strided_slice %119 {offsets = [0, 256], sizes = [2, 128], strides = [1, 1]} : vector<2x384xf32> to vector<2x128xf32>
    %146 = vector.broadcast %6 : vector<1x128xf32> to vector<2x128xf32>
    %147 = arith.addf %124, %146 : vector<2x128xf32>
    %148 = arith.mulf %134, %147 : vector<2x128xf32>
    %149 = arith.addf %145, %148 : vector<2x128xf32>
    %150 = math.tanh %149 : vector<2x128xf32>
    %cst_59 = arith.constant 1.000000e+00 : f32
    %151 = vector.broadcast %cst_59 : f32 to vector<2x128xf32>
    %152 = arith.subf %151, %144 : vector<2x128xf32>
    %153 = arith.mulf %152, %150 : vector<2x128xf32>
    %154 = arith.mulf %144, %118 : vector<2x128xf32>
    %155 = arith.addf %153, %154 : vector<2x128xf32>
    %156 = vector.extract_strided_slice %5 {offsets = [8, 0], sizes = [2, 384], strides = [1, 1]} : vector<16x384xf32> to vector<2x384xf32>
    %157 = arith.truncf %155 : vector<2x128xf32> to vector<2x128xbf16>
    %c0_60 = arith.constant 0 : index
    %c0_61 = arith.constant 0 : index
    %158 = vector.load %arg2[%c0_60, %c0_61] : memref<128x256xbf16, #tpu.memory_space<vmem>>, vector<128x256xbf16>
    %cst_62 = arith.constant dense<0.000000e+00> : vector<2x256xf32>
    %159 = tpu.matmul %157, %158, %cst_62 {dimension_numbers = #tpu.dot_dimension_numbers<[1], [0], [0], [1], [0, 0, 1, 1], [], []>} : vector<2x128xbf16>, vector<128x256xbf16>, vector<2x256xf32> -> vector<2x256xf32>
    %c0_63 = arith.constant 0 : index
    %c0_64 = arith.constant 0 : index
    %160 = vector.load %arg3[%c0_63, %c0_64] : memref<128x128xbf16, #tpu.memory_space<vmem>>, vector<128x128xbf16>
    %cst_65 = arith.constant dense<0.000000e+00> : vector<2x128xf32>
    %161 = tpu.matmul %157, %160, %cst_65 {dimension_numbers = #tpu.dot_dimension_numbers<[1], [0], [0], [1], [0, 0, 1, 1], [], []>} : vector<2x128xbf16>, vector<128x128xbf16>, vector<2x128xf32> -> vector<2x128xf32>
    %162 = vector.extract_strided_slice %156 {offsets = [0, 0], sizes = [2, 128], strides = [1, 1]} : vector<2x384xf32> to vector<2x128xf32>
    %163 = vector.extract_strided_slice %159 {offsets = [0, 0], sizes = [2, 128], strides = [1, 1]} : vector<2x256xf32> to vector<2x128xf32>
    %164 = arith.addf %162, %163 : vector<2x128xf32>
    %cst_66 = arith.constant 5.000000e-01 : f32
    %165 = vector.broadcast %cst_66 : f32 to vector<2x128xf32>
    %166 = arith.mulf %165, %164 : vector<2x128xf32>
    %167 = math.tanh %166 : vector<2x128xf32>
    %cst_67 = arith.constant 5.000000e-01 : f32
    %168 = vector.broadcast %cst_67 : f32 to vector<2x128xf32>
    %169 = arith.mulf %168, %167 : vector<2x128xf32>
    %cst_68 = arith.constant 5.000000e-01 : f32
    %170 = vector.broadcast %cst_68 : f32 to vector<2x128xf32>
    %171 = arith.addf %169, %170 : vector<2x128xf32>
    %172 = vector.extract_strided_slice %156 {offsets = [0, 128], sizes = [2, 128], strides = [1, 1]} : vector<2x384xf32> to vector<2x128xf32>
    %173 = vector.extract_strided_slice %159 {offsets = [0, 128], sizes = [2, 128], strides = [1, 1]} : vector<2x256xf32> to vector<2x128xf32>
    %174 = arith.addf %172, %173 : vector<2x128xf32>
    %cst_69 = arith.constant 5.000000e-01 : f32
    %175 = vector.broadcast %cst_69 : f32 to vector<2x128xf32>
    %176 = arith.mulf %175, %174 : vector<2x128xf32>
    %177 = math.tanh %176 : vector<2x128xf32>
    %cst_70 = arith.constant 5.000000e-01 : f32
    %178 = vector.broadcast %cst_70 : f32 to vector<2x128xf32>
    %179 = arith.mulf %178, %177 : vector<2x128xf32>
    %cst_71 = arith.constant 5.000000e-01 : f32
    %180 = vector.broadcast %cst_71 : f32 to vector<2x128xf32>
    %181 = arith.addf %179, %180 : vector<2x128xf32>
    %182 = vector.extract_strided_slice %156 {offsets = [0, 256], sizes = [2, 128], strides = [1, 1]} : vector<2x384xf32> to vector<2x128xf32>
    %183 = vector.broadcast %6 : vector<1x128xf32> to vector<2x128xf32>
    %184 = arith.addf %161, %183 : vector<2x128xf32>
    %185 = arith.mulf %171, %184 : vector<2x128xf32>
    %186 = arith.addf %182, %185 : vector<2x128xf32>
    %187 = math.tanh %186 : vector<2x128xf32>
    %cst_72 = arith.constant 1.000000e+00 : f32
    %188 = vector.broadcast %cst_72 : f32 to vector<2x128xf32>
    %189 = arith.subf %188, %181 : vector<2x128xf32>
    %190 = arith.mulf %189, %187 : vector<2x128xf32>
    %191 = arith.mulf %181, %155 : vector<2x128xf32>
    %192 = arith.addf %190, %191 : vector<2x128xf32>
    %193 = vector.extract_strided_slice %5 {offsets = [10, 0], sizes = [2, 384], strides = [1, 1]} : vector<16x384xf32> to vector<2x384xf32>
    %194 = arith.truncf %192 : vector<2x128xf32> to vector<2x128xbf16>
    %c0_73 = arith.constant 0 : index
    %c0_74 = arith.constant 0 : index
    %195 = vector.load %arg2[%c0_73, %c0_74] : memref<128x256xbf16, #tpu.memory_space<vmem>>, vector<128x256xbf16>
    %cst_75 = arith.constant dense<0.000000e+00> : vector<2x256xf32>
    %196 = tpu.matmul %194, %195, %cst_75 {dimension_numbers = #tpu.dot_dimension_numbers<[1], [0], [0], [1], [0, 0, 1, 1], [], []>} : vector<2x128xbf16>, vector<128x256xbf16>, vector<2x256xf32> -> vector<2x256xf32>
    %c0_76 = arith.constant 0 : index
    %c0_77 = arith.constant 0 : index
    %197 = vector.load %arg3[%c0_76, %c0_77] : memref<128x128xbf16, #tpu.memory_space<vmem>>, vector<128x128xbf16>
    %cst_78 = arith.constant dense<0.000000e+00> : vector<2x128xf32>
    %198 = tpu.matmul %194, %197, %cst_78 {dimension_numbers = #tpu.dot_dimension_numbers<[1], [0], [0], [1], [0, 0, 1, 1], [], []>} : vector<2x128xbf16>, vector<128x128xbf16>, vector<2x128xf32> -> vector<2x128xf32>
    %199 = vector.extract_strided_slice %193 {offsets = [0, 0], sizes = [2, 128], strides = [1, 1]} : vector<2x384xf32> to vector<2x128xf32>
    %200 = vector.extract_strided_slice %196 {offsets = [0, 0], sizes = [2, 128], strides = [1, 1]} : vector<2x256xf32> to vector<2x128xf32>
    %201 = arith.addf %199, %200 : vector<2x128xf32>
    %cst_79 = arith.constant 5.000000e-01 : f32
    %202 = vector.broadcast %cst_79 : f32 to vector<2x128xf32>
    %203 = arith.mulf %202, %201 : vector<2x128xf32>
    %204 = math.tanh %203 : vector<2x128xf32>
    %cst_80 = arith.constant 5.000000e-01 : f32
    %205 = vector.broadcast %cst_80 : f32 to vector<2x128xf32>
    %206 = arith.mulf %205, %204 : vector<2x128xf32>
    %cst_81 = arith.constant 5.000000e-01 : f32
    %207 = vector.broadcast %cst_81 : f32 to vector<2x128xf32>
    %208 = arith.addf %206, %207 : vector<2x128xf32>
    %209 = vector.extract_strided_slice %193 {offsets = [0, 128], sizes = [2, 128], strides = [1, 1]} : vector<2x384xf32> to vector<2x128xf32>
    %210 = vector.extract_strided_slice %196 {offsets = [0, 128], sizes = [2, 128], strides = [1, 1]} : vector<2x256xf32> to vector<2x128xf32>
    %211 = arith.addf %209, %210 : vector<2x128xf32>
    %cst_82 = arith.constant 5.000000e-01 : f32
    %212 = vector.broadcast %cst_82 : f32 to vector<2x128xf32>
    %213 = arith.mulf %212, %211 : vector<2x128xf32>
    %214 = math.tanh %213 : vector<2x128xf32>
    %cst_83 = arith.constant 5.000000e-01 : f32
    %215 = vector.broadcast %cst_83 : f32 to vector<2x128xf32>
    %216 = arith.mulf %215, %214 : vector<2x128xf32>
    %cst_84 = arith.constant 5.000000e-01 : f32
    %217 = vector.broadcast %cst_84 : f32 to vector<2x128xf32>
    %218 = arith.addf %216, %217 : vector<2x128xf32>
    %219 = vector.extract_strided_slice %193 {offsets = [0, 256], sizes = [2, 128], strides = [1, 1]} : vector<2x384xf32> to vector<2x128xf32>
    %220 = vector.broadcast %6 : vector<1x128xf32> to vector<2x128xf32>
    %221 = arith.addf %198, %220 : vector<2x128xf32>
    %222 = arith.mulf %208, %221 : vector<2x128xf32>
    %223 = arith.addf %219, %222 : vector<2x128xf32>
    %224 = math.tanh %223 : vector<2x128xf32>
    %cst_85 = arith.constant 1.000000e+00 : f32
    %225 = vector.broadcast %cst_85 : f32 to vector<2x128xf32>
    %226 = arith.subf %225, %218 : vector<2x128xf32>
    %227 = arith.mulf %226, %224 : vector<2x128xf32>
    %228 = arith.mulf %218, %192 : vector<2x128xf32>
    %229 = arith.addf %227, %228 : vector<2x128xf32>
    %230 = vector.extract_strided_slice %5 {offsets = [12, 0], sizes = [2, 384], strides = [1, 1]} : vector<16x384xf32> to vector<2x384xf32>
    %231 = arith.truncf %229 : vector<2x128xf32> to vector<2x128xbf16>
    %c0_86 = arith.constant 0 : index
    %c0_87 = arith.constant 0 : index
    %232 = vector.load %arg2[%c0_86, %c0_87] : memref<128x256xbf16, #tpu.memory_space<vmem>>, vector<128x256xbf16>
    %cst_88 = arith.constant dense<0.000000e+00> : vector<2x256xf32>
    %233 = tpu.matmul %231, %232, %cst_88 {dimension_numbers = #tpu.dot_dimension_numbers<[1], [0], [0], [1], [0, 0, 1, 1], [], []>} : vector<2x128xbf16>, vector<128x256xbf16>, vector<2x256xf32> -> vector<2x256xf32>
    %c0_89 = arith.constant 0 : index
    %c0_90 = arith.constant 0 : index
    %234 = vector.load %arg3[%c0_89, %c0_90] : memref<128x128xbf16, #tpu.memory_space<vmem>>, vector<128x128xbf16>
    %cst_91 = arith.constant dense<0.000000e+00> : vector<2x128xf32>
    %235 = tpu.matmul %231, %234, %cst_91 {dimension_numbers = #tpu.dot_dimension_numbers<[1], [0], [0], [1], [0, 0, 1, 1], [], []>} : vector<2x128xbf16>, vector<128x128xbf16>, vector<2x128xf32> -> vector<2x128xf32>
    %236 = vector.extract_strided_slice %230 {offsets = [0, 0], sizes = [2, 128], strides = [1, 1]} : vector<2x384xf32> to vector<2x128xf32>
    %237 = vector.extract_strided_slice %233 {offsets = [0, 0], sizes = [2, 128], strides = [1, 1]} : vector<2x256xf32> to vector<2x128xf32>
    %238 = arith.addf %236, %237 : vector<2x128xf32>
    %cst_92 = arith.constant 5.000000e-01 : f32
    %239 = vector.broadcast %cst_92 : f32 to vector<2x128xf32>
    %240 = arith.mulf %239, %238 : vector<2x128xf32>
    %241 = math.tanh %240 : vector<2x128xf32>
    %cst_93 = arith.constant 5.000000e-01 : f32
    %242 = vector.broadcast %cst_93 : f32 to vector<2x128xf32>
    %243 = arith.mulf %242, %241 : vector<2x128xf32>
    %cst_94 = arith.constant 5.000000e-01 : f32
    %244 = vector.broadcast %cst_94 : f32 to vector<2x128xf32>
    %245 = arith.addf %243, %244 : vector<2x128xf32>
    %246 = vector.extract_strided_slice %230 {offsets = [0, 128], sizes = [2, 128], strides = [1, 1]} : vector<2x384xf32> to vector<2x128xf32>
    %247 = vector.extract_strided_slice %233 {offsets = [0, 128], sizes = [2, 128], strides = [1, 1]} : vector<2x256xf32> to vector<2x128xf32>
    %248 = arith.addf %246, %247 : vector<2x128xf32>
    %cst_95 = arith.constant 5.000000e-01 : f32
    %249 = vector.broadcast %cst_95 : f32 to vector<2x128xf32>
    %250 = arith.mulf %249, %248 : vector<2x128xf32>
    %251 = math.tanh %250 : vector<2x128xf32>
    %cst_96 = arith.constant 5.000000e-01 : f32
    %252 = vector.broadcast %cst_96 : f32 to vector<2x128xf32>
    %253 = arith.mulf %252, %251 : vector<2x128xf32>
    %cst_97 = arith.constant 5.000000e-01 : f32
    %254 = vector.broadcast %cst_97 : f32 to vector<2x128xf32>
    %255 = arith.addf %253, %254 : vector<2x128xf32>
    %256 = vector.extract_strided_slice %230 {offsets = [0, 256], sizes = [2, 128], strides = [1, 1]} : vector<2x384xf32> to vector<2x128xf32>
    %257 = vector.broadcast %6 : vector<1x128xf32> to vector<2x128xf32>
    %258 = arith.addf %235, %257 : vector<2x128xf32>
    %259 = arith.mulf %245, %258 : vector<2x128xf32>
    %260 = arith.addf %256, %259 : vector<2x128xf32>
    %261 = math.tanh %260 : vector<2x128xf32>
    %cst_98 = arith.constant 1.000000e+00 : f32
    %262 = vector.broadcast %cst_98 : f32 to vector<2x128xf32>
    %263 = arith.subf %262, %255 : vector<2x128xf32>
    %264 = arith.mulf %263, %261 : vector<2x128xf32>
    %265 = arith.mulf %255, %229 : vector<2x128xf32>
    %266 = arith.addf %264, %265 : vector<2x128xf32>
    %267 = vector.extract_strided_slice %5 {offsets = [14, 0], sizes = [2, 384], strides = [1, 1]} : vector<16x384xf32> to vector<2x384xf32>
    %268 = arith.truncf %266 : vector<2x128xf32> to vector<2x128xbf16>
    %c0_99 = arith.constant 0 : index
    %c0_100 = arith.constant 0 : index
    %269 = vector.load %arg2[%c0_99, %c0_100] : memref<128x256xbf16, #tpu.memory_space<vmem>>, vector<128x256xbf16>
    %cst_101 = arith.constant dense<0.000000e+00> : vector<2x256xf32>
    %270 = tpu.matmul %268, %269, %cst_101 {dimension_numbers = #tpu.dot_dimension_numbers<[1], [0], [0], [1], [0, 0, 1, 1], [], []>} : vector<2x128xbf16>, vector<128x256xbf16>, vector<2x256xf32> -> vector<2x256xf32>
    %c0_102 = arith.constant 0 : index
    %c0_103 = arith.constant 0 : index
    %271 = vector.load %arg3[%c0_102, %c0_103] : memref<128x128xbf16, #tpu.memory_space<vmem>>, vector<128x128xbf16>
    %cst_104 = arith.constant dense<0.000000e+00> : vector<2x128xf32>
    %272 = tpu.matmul %268, %271, %cst_104 {dimension_numbers = #tpu.dot_dimension_numbers<[1], [0], [0], [1], [0, 0, 1, 1], [], []>} : vector<2x128xbf16>, vector<128x128xbf16>, vector<2x128xf32> -> vector<2x128xf32>
    %273 = vector.extract_strided_slice %267 {offsets = [0, 0], sizes = [2, 128], strides = [1, 1]} : vector<2x384xf32> to vector<2x128xf32>
    %274 = vector.extract_strided_slice %270 {offsets = [0, 0], sizes = [2, 128], strides = [1, 1]} : vector<2x256xf32> to vector<2x128xf32>
    %275 = arith.addf %273, %274 : vector<2x128xf32>
    %cst_105 = arith.constant 5.000000e-01 : f32
    %276 = vector.broadcast %cst_105 : f32 to vector<2x128xf32>
    %277 = arith.mulf %276, %275 : vector<2x128xf32>
    %278 = math.tanh %277 : vector<2x128xf32>
    %cst_106 = arith.constant 5.000000e-01 : f32
    %279 = vector.broadcast %cst_106 : f32 to vector<2x128xf32>
    %280 = arith.mulf %279, %278 : vector<2x128xf32>
    %cst_107 = arith.constant 5.000000e-01 : f32
    %281 = vector.broadcast %cst_107 : f32 to vector<2x128xf32>
    %282 = arith.addf %280, %281 : vector<2x128xf32>
    %283 = vector.extract_strided_slice %267 {offsets = [0, 128], sizes = [2, 128], strides = [1, 1]} : vector<2x384xf32> to vector<2x128xf32>
    %284 = vector.extract_strided_slice %270 {offsets = [0, 128], sizes = [2, 128], strides = [1, 1]} : vector<2x256xf32> to vector<2x128xf32>
    %285 = arith.addf %283, %284 : vector<2x128xf32>
    %cst_108 = arith.constant 5.000000e-01 : f32
    %286 = vector.broadcast %cst_108 : f32 to vector<2x128xf32>
    %287 = arith.mulf %286, %285 : vector<2x128xf32>
    %288 = math.tanh %287 : vector<2x128xf32>
    %cst_109 = arith.constant 5.000000e-01 : f32
    %289 = vector.broadcast %cst_109 : f32 to vector<2x128xf32>
    %290 = arith.mulf %289, %288 : vector<2x128xf32>
    %cst_110 = arith.constant 5.000000e-01 : f32
    %291 = vector.broadcast %cst_110 : f32 to vector<2x128xf32>
    %292 = arith.addf %290, %291 : vector<2x128xf32>
    %293 = vector.extract_strided_slice %267 {offsets = [0, 256], sizes = [2, 128], strides = [1, 1]} : vector<2x384xf32> to vector<2x128xf32>
    %294 = vector.broadcast %6 : vector<1x128xf32> to vector<2x128xf32>
    %295 = arith.addf %272, %294 : vector<2x128xf32>
    %296 = arith.mulf %282, %295 : vector<2x128xf32>
    %297 = arith.addf %293, %296 : vector<2x128xf32>
    %298 = math.tanh %297 : vector<2x128xf32>
    %cst_111 = arith.constant 1.000000e+00 : f32
    %299 = vector.broadcast %cst_111 : f32 to vector<2x128xf32>
    %300 = arith.subf %299, %292 : vector<2x128xf32>
    %301 = arith.mulf %300, %298 : vector<2x128xf32>
    %302 = arith.mulf %292, %266 : vector<2x128xf32>
    %303 = arith.addf %301, %302 : vector<2x128xf32>
    %304 = tpu.concatenate %44, %81, %118, %155, %192, %229, %266, %303 in 0 : vector<2x128xf32>, vector<2x128xf32>, vector<2x128xf32>, vector<2x128xf32>, vector<2x128xf32>, vector<2x128xf32>, vector<2x128xf32>, vector<2x128xf32> -> vector<16x128xf32>
    %c0_112 = arith.constant 0 : index
    %c0_113 = arith.constant 0 : index
    %305 = vector.load %arg6[%c0_112, %c0_113] : memref<128x128xf32, #tpu.memory_space<vmem>>, vector<128x128xf32>
    %cst_114 = arith.constant dense<0.000000e+00> : vector<16x128xf32>
    %306 = tpu.matmul %304, %305, %cst_114 {dimension_numbers = #tpu.dot_dimension_numbers<[1], [0], [0], [1], [0, 0, 1, 1], [], []>} : vector<16x128xf32>, vector<128x128xf32>, vector<16x128xf32> -> vector<16x128xf32>
    %c0_115 = arith.constant 0 : index
    %c0_116 = arith.constant 0 : index
    %307 = vector.load %arg7[%c0_115, %c0_116] : memref<1x128xf32, #tpu.memory_space<vmem>>, vector<1x128xf32>
    %308 = vector.broadcast %307 : vector<1x128xf32> to vector<16x128xf32>
    %309 = arith.addf %306, %308 : vector<16x128xf32>
    %c0_117 = arith.constant 0 : index
    %c0_118 = arith.constant 0 : index
    %310 = vector.load %arg8[%c0_117, %c0_118] : memref<16x128xf32, #tpu.memory_space<vmem>>, vector<16x128xf32>
    tpu.vector_store %arg8[%c0_117, %c0_118], %309 {strides = array<i32>} : memref<16x128xf32, #tpu.memory_space<vmem>>, vector<16x128xf32>,
    return
  }
}

</mosaic_0001>

<llo_original>
// kernel: fwd.1
$region0: #{fwd.1}
  #allocation0 [shape = 'u32[]', space=smem, size = 0x4, offset = 0x4, fixed_abs, tag = 'smem constant byte address 0x4 - core index']
  #allocation1 [shape = 'u32[144,128]{1,0:T(1,128)}', space=vmem, size = 0x12000, scoped, tag = 'internal scratch']
  %s0 = inlined_call_operand.vmem [shape: f32[16,128], index: 0, kind: input, shape index: {}]
  %s1 = inlined_call_operand.hbm [shape: f32[128,384], index: 1, kind: input, shape index: {}]
  %s2 = inlined_call_operand.vmem [shape: bf16[128,256], index: 2, kind: input, shape index: {}]
  %s3 = inlined_call_operand.vmem [shape: bf16[128,128], index: 3, kind: input, shape index: {}]
  %s4 = inlined_call_operand.vmem [shape: f32[1,384], index: 4, kind: input, shape index: {}]
  %s5 = inlined_call_operand.vmem [shape: f32[1,128], index: 5, kind: input, shape index: {}]
  %s6 = inlined_call_operand.vmem [shape: f32[128,128], index: 6, kind: input, shape index: {}]
  %s7 = inlined_call_operand.vmem [shape: f32[1,128], index: 7, kind: input, shape index: {}]
  %s8 = inlined_call_operand.vmem [shape: f32[16,128], index: 8, kind: output, shape index: {}]
  %s9 = sld [smem:[#allocation0]]
  $region46: #{fwd.1} parent=0
    _
  %s11 = ssub.s32 1, %s9
  %s12 = scalar_select 0, %s11, %s9
  $region1: #{fwd.1} parent=0
    #allocation2 [shape = 'u8[196608]{0}', space=vmem, size = 0x30000, scoped, tag = 'input window, operand 1, single buffered']
    #allocation3 [shape = 's32[1]{0}', space=sflag, size = 0x4, scoped, tag = 'scoped memory for fwd.1']
    %13 = vsyncpa [#allocation3], 0
    // Predicated region
    $region2: #{fwd.1} parent=1 // pred_check
      _
    $region3: #{fwd.1} parent=1 // pred_check_branch
      %15 = sbr.rel (0) target = $region5
    $region4: #{fwd.1} parent=1 // pred_region
      _
    $region5: #{fwd.1} parent=1 // pred_fallthru
      _
    // Predicated region
    $region6: #{fwd.1} parent=1 // pred_check
      _
    $region7: #{fwd.1} parent=1 // pred_check_branch
      %17 = sbr.rel (0) target = $region9
    $region8: #{fwd.1} parent=1 // pred_region
      %s19 = ssub.s32 6144, 6144
      %20 = vsyncadd [#allocation3], %s19
      %s21 = sshll.u32 [#allocation2], 4
      %s22 = int_to_ptr.vmem [resolvable:$true] %s21
      %27 = dma.hbm_to_vmem [thread:$0]  %s1, 6144, %s22, [#allocation3], 384, 384, 24
    $region9: #{fwd.1} parent=1 // pred_fallthru
      _
    // Predicated region
    $region10: #{fwd.1} parent=1 // pred_check
      _
    $region11: #{fwd.1} parent=1 // pred_check_branch
      %29 = sbr.rel (0) target = $region13
    $region12: #{fwd.1} parent=1 // pred_region
      _
    $region13: #{fwd.1} parent=1 // pred_fallthru
      _
    // Predicated region
    $region14: #{fwd.1} parent=1 // pred_check
      _
    $region15: #{fwd.1} parent=1 // pred_check_branch
      %31 = sbr.rel (0) target = $region17
    $region16: #{fwd.1} parent=1 // pred_region
      _
    $region17: #{fwd.1} parent=1 // pred_fallthru
      _
    // Predicated region
    $region18: #{fwd.1} parent=1 // pred_check
      _
    $region19: #{fwd.1} parent=1 // pred_check_branch
      %33 = sbr.rel (0) target = $region21
    $region20: #{fwd.1} parent=1 // pred_region
      _
    $region21: #{fwd.1} parent=1 // pred_fallthru
      _
    // Predicated region
    $region22: #{fwd.1} parent=1 // pred_check
      _
    $region23: #{fwd.1} parent=1 // pred_check_branch
      %35 = sbr.rel (0) target = $region25
    $region24: #{fwd.1} parent=1 // pred_region
      _
    $region25: #{fwd.1} parent=1 // pred_fallthru
      _
    // Predicated region
    $region26: #{fwd.1} parent=1 // pred_check
      _
    $region27: #{fwd.1} parent=1 // pred_check_branch
      %37 = sbr.rel (0) target = $region29
    $region28: #{fwd.1} parent=1 // pred_region
      _
    $region29: #{fwd.1} parent=1 // pred_fallthru
      _
    // Predicated region
    $region30: #{fwd.1} parent=1 // pred_check
      _
    $region31: #{fwd.1} parent=1 // pred_check_branch
      %39 = sbr.rel (0) target = $region33
    $region32: #{fwd.1} parent=1 // pred_region
      _
    $region33: #{fwd.1} parent=1 // pred_fallthru
      _
    // Predicated region
    $region34: #{fwd.1} parent=1 // pred_check
      _
    $region35: #{fwd.1} parent=1 // pred_check_branch
      %41 = sbr.rel (0) target = $region37
    $region36: #{fwd.1} parent=1 // pred_region
      %42 = dma.done [#allocation3], 6144
    $region37: #{fwd.1} parent=1 // pred_fallthru
      _
    %v44 = vld [vmem:[%s0] sm:$0xff]
    %v45 = vld [vmem:[%s0 + $0x8] sm:$0xff]
    %v46 = vld [vmem:[#allocation2] sm:$0xff]
    %v47 = vld [vmem:[#allocation2 + $0x8] sm:$0xff]
    %v48 = vld [vmem:[#allocation2 + $0x10] sm:$0xff]
    %v49 = vld [vmem:[#allocation2 + $0x18] sm:$0xff]
    %v50 = vld [vmem:[#allocation2 + $0x20] sm:$0xff]
    %v51 = vld [vmem:[#allocation2 + $0x28] sm:$0xff]
    %v52 = vld [vmem:[#allocation2 + $0x30] sm:$0xff]
    %v53 = vld [vmem:[#allocation2 + $0x38] sm:$0xff]
    %v54 = vld [vmem:[#allocation2 + $0x40] sm:$0xff]
    %v55 = vld [vmem:[#allocation2 + $0x48] sm:$0xff]
    %v56 = vld [vmem:[#allocation2 + $0x50] sm:$0xff]
    %v57 = vld [vmem:[#allocation2 + $0x58] sm:$0xff]
    %v58 = vld [vmem:[#allocation2 + $0x60] sm:$0xff]
    %v59 = vld [vmem:[#allocation2 + $0x68] sm:$0xff]
    %v60 = vld [vmem:[#allocation2 + $0x70] sm:$0xff]
    %v61 = vld [vmem:[#allocation2 + $0x78] sm:$0xff]
    %v62 = vld [vmem:[#allocation2 + $0x80] sm:$0xff]
    %v63 = vld [vmem:[#allocation2 + $0x88] sm:$0xff]
    %v64 = vld [vmem:[#allocation2 + $0x90] sm:$0xff]
    %v65 = vld [vmem:[#allocation2 + $0x98] sm:$0xff]
    %v66 = vld [vmem:[#allocation2 + $0xa0] sm:$0xff]
    %v67 = vld [vmem:[#allocation2 + $0xa8] sm:$0xff]
    %v68 = vld [vmem:[#allocation2 + $0xb0] sm:$0xff]
    %v69 = vld [vmem:[#allocation2 + $0xb8] sm:$0xff]
    %v70 = vld [vmem:[#allocation2 + $0xc0] sm:$0xff]
    %v71 = vld [vmem:[#allocation2 + $0xc8] sm:$0xff]
    %v72 = vld [vmem:[#allocation2 + $0xd0] sm:$0xff]
    %v73 = vld [vmem:[#allocation2 + $0xd8] sm:$0xff]
    %v74 = vld [vmem:[#allocation2 + $0xe0] sm:$0xff]
    %v75 = vld [vmem:[#allocation2 + $0xe8] sm:$0xff]
    %v76 = vld [vmem:[#allocation2 + $0xf0] sm:$0xff]
    %v77 = vld [vmem:[#allocation2 + $0xf8] sm:$0xff]
    %v78 = vld [vmem:[#allocation2 + $0x100] sm:$0xff]
    %v79 = vld [vmem:[#allocation2 + $0x108] sm:$0xff]
    %v80 = vld [vmem:[#allocation2 + $0x110] sm:$0xff]
    %v81 = vld [vmem:[#allocation2 + $0x118] sm:$0xff]
    %v82 = vld [vmem:[#allocation2 + $0x120] sm:$0xff]
    %v83 = vld [vmem:[#allocation2 + $0x128] sm:$0xff]
    %v84 = vld [vmem:[#allocation2 + $0x130] sm:$0xff]
    %v85 = vld [vmem:[#allocation2 + $0x138] sm:$0xff]
    %v86 = vld [vmem:[#allocation2 + $0x140] sm:$0xff]
    %v87 = vld [vmem:[#allocation2 + $0x148] sm:$0xff]
    %v88 = vld [vmem:[#allocation2 + $0x150] sm:$0xff]
    %v89 = vld [vmem:[#allocation2 + $0x158] sm:$0xff]
    %v90 = vld [vmem:[#allocation2 + $0x160] sm:$0xff]
    %v91 = vld [vmem:[#allocation2 + $0x168] sm:$0xff]
    %v92 = vld [vmem:[#allocation2 + $0x170] sm:$0xff]
    %v93 = vld [vmem:[#allocation2 + $0x178] sm:$0xff]
    %v94 = vld [vmem:[%s4] sm:$0x7]
    %v96 = vlaneseq
    %v97 = vshrl.u32 %v96, 7
    %v98 = vsub.s32 0, %v97
    %v99 = vrot.slane %v94, %v98
    %v100 = vlaneseq
    %v101 = vshrl.u32 %v100, 7
    %v102 = vsub.s32 1, %v101
    %v103 = vrot.slane %v94, %v102
    %v104 = vlaneseq
    %v105 = vshrl.u32 %v104, 7
    %v106 = vsub.s32 2, %v105
    %v107 = vrot.slane %v94, %v106
    %111 = vmatprep.subr.mxu0 %v47
    %112 = vmatpush1.msra.mxu0 %v46
    %113 = vmatprep.subr.mxu0 %v50
    %114 = vmatpush1.msra.mxu0 %v49
    %115 = vmatprep.subr.mxu0 %v53
    %116 = vmatpush1.msra.mxu0 %v52
    %117 = vmatprep.subr.mxu0 %v56
    %118 = vmatpush1.msra.mxu0 %v55
    %119 = vmatprep.subr.mxu0 %v59
    %120 = vmatpush1.msra.mxu0 %v58
    %121 = vmatprep.subr.mxu0 %v62
    %122 = vmatpush1.msra.mxu0 %v61
    %123 = vmatprep.subr.mxu0 %v65
    %124 = vmatpush1.msra.mxu0 %v64
    %125 = vmatprep.subr.mxu0 %v68
    %126 = vmatpush1.msra.mxu0 %v67
    %127 = vmatprep.subr.mxu0 %v71
    %128 = vmatpush1.msra.mxu0 %v70
    %129 = vmatprep.subr.mxu0 %v74
    %130 = vmatpush1.msra.mxu0 %v73
    %131 = vmatprep.subr.mxu0 %v77
    %132 = vmatpush1.msra.mxu0 %v76
    %133 = vmatprep.subr.mxu0 %v80
    %134 = vmatpush1.msra.mxu0 %v79
    %135 = vmatprep.subr.mxu0 %v83
    %136 = vmatpush1.msra.mxu0 %v82
    %137 = vmatprep.subr.mxu0 %v86
    %138 = vmatpush1.msra.mxu0 %v85
    %139 = vmatprep.subr.mxu0 %v89
    %140 = vmatpush1.msra.mxu0 %v88
    %141 = vmatprep.subr.mxu0 %v92
    %142 = vmatpush1.msra.mxu0 %v91
    %143 = vmatprep.subr.mxu0 0.0
    %144 = vmatpush1.msra.mxu0 0.0
    %145 = vmatprep.subr.mxu0 0.0
    %146 = vmatpush1.msra.mxu0 0.0
    %147 = vmatprep.subr.mxu0 0.0
    %148 = vmatpush1.msra.mxu0 0.0
    %149 = vmatprep.subr.mxu0 0.0
    %150 = vmatpush1.msra.mxu0 0.0
    %151 = vmatprep.subr.mxu0 0.0
    %152 = vmatpush1.msra.mxu0 0.0
    %153 = vmatprep.subr.mxu0 0.0
    %154 = vmatpush1.msra.mxu0 0.0
    %155 = vmatprep.subr.mxu0 0.0
    %156 = vmatpush1.msra.mxu0 0.0
    %157 = vmatprep.subr.mxu0 0.0
    %158 = vmatpush1.msra.mxu0 0.0
    %159 = vmatprep.subr.mxu0 0.0
    %160 = vmatpush1.msra.mxu0 0.0
    %161 = vmatprep.subr.mxu0 0.0
    %162 = vmatpush1.msra.mxu0 0.0
    %163 = vmatprep.subr.mxu0 0.0
    %164 = vmatpush1.msra.mxu0 0.0
    %165 = vmatprep.subr.mxu0 0.0
    %166 = vmatpush1.msra.mxu0 0.0
    %167 = vmatprep.subr.mxu0 0.0
    %168 = vmatpush1.msra.mxu0 0.0
    %169 = vmatprep.subr.mxu0 0.0
    %170 = vmatpush1.msra.mxu0 0.0
    %171 = vmatprep.subr.mxu0 0.0
    %172 = vmatpush1.msra.mxu0 0.0
    %173 = vmatprep.subr.mxu0 0.0
    %174 = vmatpush1.msra.mxu0 0.0
    %175 = vmatprep.mubr.f32.mxu0 0.0
    %176 = vmatmul.mubr.f32.gmra.mrb[0].mxu0 %v44
    %v177 = vpop.f32.mrb[0].mxu0
    %v178 = vadd.f32 %v99, %v177
    %v179 = vpop.f32.mrb[0].mxu0
    %v180 = vadd.f32 %v103, %v179
    %181 = vmatprep.mubr.f32.mxu0 0.0
    %182 = vmatmul.mubr.f32.gmra.mrb[0].mxu0 %v45
    %v183 = vpop.f32.mrb[0].mxu0
    %v184 = vadd.f32 %v99, %v183
    %v185 = vpop.f32.mrb[0].mxu0
    %v186 = vadd.f32 %v103, %v185
    %187 = vdwg.mxu0
    %188 = vmatprep.subr.mxu0 0.0
    %189 = vmatpush1.msra.mxu0 %v48
    %190 = vmatprep.subr.mxu0 0.0
    %191 = vmatpush1.msra.mxu0 %v51
    %192 = vmatprep.subr.mxu0 0.0
    %193 = vmatpush1.msra.mxu0 %v54
    %194 = vmatprep.subr.mxu0 0.0
    %195 = vmatpush1.msra.mxu0 %v57
    %196 = vmatprep.subr.mxu0 0.0
    %197 = vmatpush1.msra.mxu0 %v60
    %198 = vmatprep.subr.mxu0 0.0
    %199 = vmatpush1.msra.mxu0 %v63
    %200 = vmatprep.subr.mxu0 0.0
    %201 = vmatpush1.msra.mxu0 %v66
    %202 = vmatprep.subr.mxu0 0.0
    %203 = vmatpush1.msra.mxu0 %v69
    %204 = vmatprep.subr.mxu0 0.0
    %205 = vmatpush1.msra.mxu0 %v72
    %206 = vmatprep.subr.mxu0 0.0
    %207 = vmatpush1.msra.mxu0 %v75
    %208 = vmatprep.subr.mxu0 0.0
    %209 = vmatpush1.msra.mxu0 %v78
    %210 = vmatprep.subr.mxu0 0.0
    %211 = vmatpush1.msra.mxu0 %v81
    %212 = vmatprep.subr.mxu0 0.0
    %213 = vmatpush1.msra.mxu0 %v84
    %214 = vmatprep.subr.mxu0 0.0
    %215 = vmatpush1.msra.mxu0 %v87
    %216 = vmatprep.subr.mxu0 0.0
    %217 = vmatpush1.msra.mxu0 %v90
    %218 = vmatprep.subr.mxu0 0.0
    %219 = vmatpush1.msra.mxu0 %v93
    %220 = vmatprep.subr.mxu0 0.0
    %221 = vmatpush1.msra.mxu0 0.0
    %222 = vmatprep.subr.mxu0 0.0
    %223 = vmatpush1.msra.mxu0 0.0
    %224 = vmatprep.subr.mxu0 0.0
    %225 = vmatpush1.msra.mxu0 0.0
    %226 = vmatprep.subr.mxu0 0.0
    %227 = vmatpush1.msra.mxu0 0.0
    %228 = vmatprep.subr.mxu0 0.0
    %229 = vmatpush1.msra.mxu0 0.0
    %230 = vmatprep.subr.mxu0 0.0
    %231 = vmatpush1.msra.mxu0 0.0
    %232 = vmatprep.subr.mxu0 0.0
    %233 = vmatpush1.msra.mxu0 0.0
    %234 = vmatprep.subr.mxu0 0.0
    %235 = vmatpush1.msra.mxu0 0.0
    %236 = vmatprep.subr.mxu0 0.0
    %237 = vmatpush1.msra.mxu0 0.0
    %238 = vmatprep.subr.mxu0 0.0
    %239 = vmatpush1.msra.mxu0 0.0
    %240 = vmatprep.subr.mxu0 0.0
    %241 = vmatpush1.msra.mxu0 0.0
    %242 = vmatprep.subr.mxu0 0.0
    %243 = vmatpush1.msra.mxu0 0.0
    %244 = vmatprep.subr.mxu0 0.0
    %245 = vmatpush1.msra.mxu0 0.0
    %246 = vmatprep.subr.mxu0 0.0
    %247 = vmatpush1.msra.mxu0 0.0
    %248 = vmatprep.subr.mxu0 0.0
    %249 = vmatpush1.msra.mxu0 0.0
    %250 = vmatprep.subr.mxu0 0.0
    %251 = vmatpush1.msra.mxu0 0.0
    %252 = vmatprep.mubr.f32.mxu0 0.0
    %253 = vmatmul.mubr.f32.gmra.mrb[0].mxu0 %v44
    %v254 = vpop.f32.mrb[0].mxu0
    %v255 = vadd.f32 %v107, %v254
    %v256 = vpop.f32.mrb[0].mxu0
    %257 = vmatprep.mubr.f32.mxu0 0.0
    %258 = vmatmul.mubr.f32.gmra.mrb[0].mxu0 %v45
    %v259 = vpop.f32.mrb[0].mxu0
    %v260 = vadd.f32 %v107, %v259
    %v261 = vpop.f32.mrb[0].mxu0
    %262 = vdwg.mxu0
    %v263 = vld [vmem:[%s5] sm:$0x1]
    %v264 = vld [vmem:[%s2] sm:$0xff]
    %v265 = vld [vmem:[%s2 + $0x8] sm:$0xff]
    %v266 = vld [vmem:[%s2 + $0x10] sm:$0xff]
    %v267 = vld [vmem:[%s2 + $0x18] sm:$0xff]
    %v268 = vld [vmem:[%s2 + $0x20] sm:$0xff]
    %v269 = vld [vmem:[%s2 + $0x28] sm:$0xff]
    %v270 = vld [vmem:[%s2 + $0x30] sm:$0xff]
    %v271 = vld [vmem:[%s2 + $0x38] sm:$0xff]
    %v272 = vld [vmem:[%s2 + $0x40] sm:$0xff]
    %v273 = vld [vmem:[%s2 + $0x48] sm:$0xff]
    %v274 = vld [vmem:[%s2 + $0x50] sm:$0xff]
    %v275 = vld [vmem:[%s2 + $0x58] sm:$0xff]
    %v276 = vld [vmem:[%s2 + $0x60] sm:$0xff]
    %v277 = vld [vmem:[%s2 + $0x68] sm:$0xff]
    %v278 = vld [vmem:[%s2 + $0x70] sm:$0xff]
    %v279 = vld [vmem:[%s2 + $0x78] sm:$0xff]
    %v296 = vunpack.c.l.b16 %v264
    %v297 = vunpack.c.h.b16 %v264
    %v298 = vunpack.c.l.b16 %v265
    %v299 = vunpack.c.h.b16 %v265
    %v300 = vunpack.c.l.b16 %v266
    %v301 = vunpack.c.h.b16 %v266
    %v302 = vunpack.c.l.b16 %v267
    %v303 = vunpack.c.h.b16 %v267
    %v304 = vunpack.c.l.b16 %v268
    %v305 = vunpack.c.h.b16 %v268
    %v306 = vunpack.c.l.b16 %v269
    %v307 = vunpack.c.h.b16 %v269
    %v308 = vunpack.c.l.b16 %v270
    %v309 = vunpack.c.h.b16 %v270
    %v310 = vunpack.c.l.b16 %v271
    %v311 = vunpack.c.h.b16 %v271
    %v312 = vunpack.c.l.b16 %v272
    %v313 = vunpack.c.h.b16 %v272
    %v314 = vunpack.c.l.b16 %v273
    %v315 = vunpack.c.h.b16 %v273
    %v316 = vunpack.c.l.b16 %v274
    %v317 = vunpack.c.h.b16 %v274
    %v318 = vunpack.c.l.b16 %v275
    %v319 = vunpack.c.h.b16 %v275
    %v320 = vunpack.c.l.b16 %v276
    %v321 = vunpack.c.h.b16 %v276
    %v322 = vunpack.c.l.b16 %v277
    %v323 = vunpack.c.h.b16 %v277
    %v324 = vunpack.c.l.b16 %v278
    %v325 = vunpack.c.h.b16 %v278
    %v326 = vunpack.c.l.b16 %v279
    %v327 = vunpack.c.h.b16 %v279
    %v328 = vpack.c.b16 %v298, %v296
    %v329 = vpack.c.b16 %v299, %v297
    %v330 = vpack.c.b16 %v302, %v300
    %v331 = vpack.c.b16 %v303, %v301
    %v332 = vpack.c.b16 %v306, %v304
    %v333 = vpack.c.b16 %v307, %v305
    %v334 = vpack.c.b16 %v310, %v308
    %v335 = vpack.c.b16 %v311, %v309
    %v336 = vpack.c.b16 %v314, %v312
    %v337 = vpack.c.b16 %v315, %v313
    %v338 = vpack.c.b16 %v318, %v316
    %v339 = vpack.c.b16 %v319, %v317
    %v340 = vpack.c.b16 %v322, %v320
    %v341 = vpack.c.b16 %v323, %v321
    %v342 = vpack.c.b16 %v326, %v324
    %v343 = vpack.c.b16 %v327, %v325
    %360 = vmatprep.subr.bf16.mxu0 %v329
    %361 = vmatpush1.bf16.msra.mxu0 %v328
    %362 = vmatprep.subr.bf16.mxu0 %v331
    %363 = vmatpush1.bf16.msra.mxu0 %v330
    %364 = vmatprep.subr.bf16.mxu0 %v333
    %365 = vmatpush1.bf16.msra.mxu0 %v332
    %366 = vmatprep.subr.bf16.mxu0 %v335
    %367 = vmatpush1.bf16.msra.mxu0 %v334
    %368 = vmatprep.subr.bf16.mxu0 %v337
    %369 = vmatpush1.bf16.msra.mxu0 %v336
    %370 = vmatprep.subr.bf16.mxu0 %v339
    %371 = vmatpush1.bf16.msra.mxu0 %v338
    %372 = vmatprep.subr.bf16.mxu0 %v341
    %373 = vmatpush1.bf16.msra.mxu0 %v340
    %374 = vmatprep.subr.bf16.mxu0 %v343
    %375 = vmatpush1.bf16.msra.mxu0 %v342
    %376 = vmatprep.subr.bf16.mxu0 0
    %377 = vmatpush1.bf16.msra.mxu0 0
    %378 = vmatprep.subr.bf16.mxu0 0
    %379 = vmatpush1.bf16.msra.mxu0 0
    %380 = vmatprep.subr.bf16.mxu0 0
    %381 = vmatpush1.bf16.msra.mxu0 0
    %382 = vmatprep.subr.bf16.mxu0 0
    %383 = vmatpush1.bf16.msra.mxu0 0
    %384 = vmatprep.subr.bf16.mxu0 0
    %385 = vmatpush1.bf16.msra.mxu0 0
    %386 = vmatprep.subr.bf16.mxu0 0
    %387 = vmatpush1.bf16.msra.mxu0 0
    %388 = vmatprep.subr.bf16.mxu0 0
    %389 = vmatpush1.bf16.msra.mxu0 0
    %390 = vmatprep.subr.bf16.mxu0 0
    %391 = vmatpush1.bf16.msra.mxu0 0
    %392 = vmatprep.mubr.bf16.mxu0 0
    %393 = vmatmul.mubr.bf16.gmra.mrb[0].mxu0 0
    %v394 = vpop.f32.mrb[0].mxu0
    %v395 = vadd.f32 0.0, %v394
    %v396 = vpop.f32.mrb[0].mxu0
    %v397 = vadd.f32 0.0, %v396
    %v398 = vpop.f32.mrb[0].mxu0
    %v399 = vpop.f32.mrb[0].mxu0
    %400 = vdwg.mxu0
    %v401 = vld [vmem:[%s3] sm:$0xf]
    %v402 = vld [vmem:[%s3 + $0x4] sm:$0xf]
    %v403 = vld [vmem:[%s3 + $0x8] sm:$0xf]
    %v404 = vld [vmem:[%s3 + $0xc] sm:$0xf]
    %v405 = vld [vmem:[%s3 + $0x10] sm:$0xf]
    %v406 = vld [vmem:[%s3 + $0x14] sm:$0xf]
    %v407 = vld [vmem:[%s3 + $0x18] sm:$0xf]
    %v408 = vld [vmem:[%s3 + $0x1c] sm:$0xf]
    %v409 = vld [vmem:[%s3 + $0x20] sm:$0xf]
    %v410 = vld [vmem:[%s3 + $0x24] sm:$0xf]
    %v411 = vld [vmem:[%s3 + $0x28] sm:$0xf]
    %v412 = vld [vmem:[%s3 + $0x2c] sm:$0xf]
    %v413 = vld [vmem:[%s3 + $0x30] sm:$0xf]
    %v414 = vld [vmem:[%s3 + $0x34] sm:$0xf]
    %v415 = vld [vmem:[%s3 + $0x38] sm:$0xf]
    %v416 = vld [vmem:[%s3 + $0x3c] sm:$0xf]
    %v417 = vadd.f32 %v178, %v395
    %v418 = vmul.f32 %v417, 0.5
    %v419 = vtanh.pop %v418
    %v420 = vmul.f32 %v419, 0.5
    %v421 = vadd.f32 %v420, 0.5
    %v422 = vadd.f32 %v180, %v397
    %v423 = vmul.f32 %v422, 0.5
    %v424 = vtanh.pop %v423
    %v425 = vmul.f32 %v424, 0.5
    %v426 = vadd.f32 %v425, 0.5
    %v428 = vlaneseq
    %v429 = vshrl.u32 %v428, 7
    %v430 = vsub.s32 0, %v429
    %v431 = vrot.slane %v263, %v430
    %v449 = vunpack.c.l.b16 %v401
    %v450 = vunpack.c.l.b16 %v402
    %v451 = vunpack.c.l.b16 %v403
    %v452 = vunpack.c.l.b16 %v404
    %v453 = vunpack.c.l.b16 %v405
    %v454 = vunpack.c.l.b16 %v406
    %v455 = vunpack.c.l.b16 %v407
    %v456 = vunpack.c.l.b16 %v408
    %v457 = vunpack.c.l.b16 %v409
    %v458 = vunpack.c.l.b16 %v410
    %v459 = vunpack.c.l.b16 %v411
    %v460 = vunpack.c.l.b16 %v412
    %v461 = vunpack.c.l.b16 %v413
    %v462 = vunpack.c.l.b16 %v414
    %v463 = vunpack.c.l.b16 %v415
    %v464 = vunpack.c.l.b16 %v416
    %v465 = vpack.c.b16 %v450, %v449
    %v466 = vpack.c.b16 %v452, %v451
    %v467 = vpack.c.b16 %v454, %v453
    %v468 = vpack.c.b16 %v456, %v455
    %v469 = vpack.c.b16 %v458, %v457
    %v470 = vpack.c.b16 %v460, %v459
    %v471 = vpack.c.b16 %v462, %v461
    %v472 = vpack.c.b16 %v464, %v463
    %481 = vmatprep.subr.bf16.mxu0 0
    %482 = vmatpush1.bf16.msra.mxu0 %v465
    %483 = vmatprep.subr.bf16.mxu0 0
    %484 = vmatpush1.bf16.msra.mxu0 %v466
    %485 = vmatprep.subr.bf16.mxu0 0
    %486 = vmatpush1.bf16.msra.mxu0 %v467
    %487 = vmatprep.subr.bf16.mxu0 0
    %488 = vmatpush1.bf16.msra.mxu0 %v468
    %489 = vmatprep.subr.bf16.mxu0 0
    %490 = vmatpush1.bf16.msra.mxu0 %v469
    %491 = vmatprep.subr.bf16.mxu0 0
    %492 = vmatpush1.bf16.msra.mxu0 %v470
    %493 = vmatprep.subr.bf16.mxu0 0
    %494 = vmatpush1.bf16.msra.mxu0 %v471
    %495 = vmatprep.subr.bf16.mxu0 0
    %496 = vmatpush1.bf16.msra.mxu0 %v472
    %497 = vmatprep.subr.bf16.mxu0 0
    %498 = vmatpush1.bf16.msra.mxu0 0
    %499 = vmatprep.subr.bf16.mxu0 0
    %500 = vmatpush1.bf16.msra.mxu0 0
    %501 = vmatprep.subr.bf16.mxu0 0
    %502 = vmatpush1.bf16.msra.mxu0 0
    %503 = vmatprep.subr.bf16.mxu0 0
    %504 = vmatpush1.bf16.msra.mxu0 0
    %505 = vmatprep.subr.bf16.mxu0 0
    %506 = vmatpush1.bf16.msra.mxu0 0
    %507 = vmatprep.subr.bf16.mxu0 0
    %508 = vmatpush1.bf16.msra.mxu0 0
    %509 = vmatprep.subr.bf16.mxu0 0
    %510 = vmatpush1.bf16.msra.mxu0 0
    %511 = vmatprep.subr.bf16.mxu0 0
    %512 = vmatpush1.bf16.msra.mxu0 0
    %513 = vmatprep.mubr.bf16.mxu0 0
    %514 = vmatmul.mubr.bf16.gmra.mrb[0].mxu0 0
    %v515 = vpop.f32.mrb[0].mxu0
    %v516 = vadd.f32 %v431, %v515
    %v517 = vpop.f32.mrb[0].mxu0
    %v518 = vpop.f32.mrb[0].mxu0
    %v519 = vpop.f32.mrb[0].mxu0
    %520 = vdwg.mxu0
    %v521 = vmul.f32 %v421, %v516
    %v522 = vadd.f32 %v255, %v521
    %v523 = vtanh.pop %v522
    %v524 = vsub.f32 1.0, %v426
    %v525 = vmul.f32 %v524, %v523
    %v526 = vmul.f32 %v426, 0.0
    %v527 = vadd.f32 %v525, %v526
    %v528 = vpack.c.bf16 %v527, %v527
    %529 = vmatprep.subr.bf16.mxu0 %v329
    %530 = vmatpush1.bf16.msra.mxu0 %v328
    %531 = vmatprep.subr.bf16.mxu0 %v331
    %532 = vmatpush1.bf16.msra.mxu0 %v330
    %533 = vmatprep.subr.bf16.mxu0 %v333
    %534 = vmatpush1.bf16.msra.mxu0 %v332
    %535 = vmatprep.subr.bf16.mxu0 %v335
    %536 = vmatpush1.bf16.msra.mxu0 %v334
    %537 = vmatprep.subr.bf16.mxu0 %v337
    %538 = vmatpush1.bf16.msra.mxu0 %v336
    %539 = vmatprep.subr.bf16.mxu0 %v339
    %540 = vmatpush1.bf16.msra.mxu0 %v338
    %541 = vmatprep.subr.bf16.mxu0 %v341
    %542 = vmatpush1.bf16.msra.mxu0 %v340
    %543 = vmatprep.subr.bf16.mxu0 %v343
    %544 = vmatpush1.bf16.msra.mxu0 %v342
    %545 = vmatprep.subr.bf16.mxu0 0
    %546 = vmatpush1.bf16.msra.mxu0 0
    %547 = vmatprep.subr.bf16.mxu0 0
    %548 = vmatpush1.bf16.msra.mxu0 0
    %549 = vmatprep.subr.bf16.mxu0 0
    %550 = vmatpush1.bf16.msra.mxu0 0
    %551 = vmatprep.subr.bf16.mxu0 0
    %552 = vmatpush1.bf16.msra.mxu0 0
    %553 = vmatprep.subr.bf16.mxu0 0
    %554 = vmatpush1.bf16.msra.mxu0 0
    %555 = vmatprep.subr.bf16.mxu0 0
    %556 = vmatpush1.bf16.msra.mxu0 0
    %557 = vmatprep.subr.bf16.mxu0 0
    %558 = vmatpush1.bf16.msra.mxu0 0
    %559 = vmatprep.subr.bf16.mxu0 0
    %560 = vmatpush1.bf16.msra.mxu0 0
    %561 = vmatprep.mubr.bf16.mxu0 0
    %562 = vmatmul.mubr.bf16.gmra.mrb[0].mxu0 %v528
    %v563 = vpop.f32.mrb[0].mxu0
    %v564 = vadd.f32 0.0, %v563
    %v565 = vpop.f32.mrb[0].mxu0
    %v566 = vadd.f32 0.0, %v565
    %v567 = vpop.f32.mrb[0].mxu0
    %v568 = vpop.f32.mrb[0].mxu0
    %569 = vdwg.mxu0
    %v571 = vrot.slane %v564, 6
    %v573 = vadd.f32 %v178, %v571
    %v574 = vmul.f32 %v573, 0.5
    %v575 = vtanh.pop %v574
    %v576 = vmul.f32 %v575, 0.5
    %v577 = vadd.f32 %v576, 0.5
    %v579 = vrot.slane %v566, 6
    %v581 = vadd.f32 %v180, %v579
    %v582 = vmul.f32 %v581, 0.5
    %v583 = vtanh.pop %v582
    %v584 = vmul.f32 %v583, 0.5
    %v585 = vadd.f32 %v584, 0.5
    %586 = vmatprep.subr.bf16.mxu0 0
    %587 = vmatpush1.bf16.msra.mxu0 %v465
    %588 = vmatprep.subr.bf16.mxu0 0
    %589 = vmatpush1.bf16.msra.mxu0 %v466
    %590 = vmatprep.subr.bf16.mxu0 0
    %591 = vmatpush1.bf16.msra.mxu0 %v467
    %592 = vmatprep.subr.bf16.mxu0 0
    %593 = vmatpush1.bf16.msra.mxu0 %v468
    %594 = vmatprep.subr.bf16.mxu0 0
    %595 = vmatpush1.bf16.msra.mxu0 %v469
    %596 = vmatprep.subr.bf16.mxu0 0
    %597 = vmatpush1.bf16.msra.mxu0 %v470
    %598 = vmatprep.subr.bf16.mxu0 0
    %599 = vmatpush1.bf16.msra.mxu0 %v471
    %600 = vmatprep.subr.bf16.mxu0 0
    %601 = vmatpush1.bf16.msra.mxu0 %v472
    %602 = vmatprep.subr.bf16.mxu0 0
    %603 = vmatpush1.bf16.msra.mxu0 0
    %604 = vmatprep.subr.bf16.mxu0 0
    %605 = vmatpush1.bf16.msra.mxu0 0
    %606 = vmatprep.subr.bf16.mxu0 0
    %607 = vmatpush1.bf16.msra.mxu0 0
    %608 = vmatprep.subr.bf16.mxu0 0
    %609 = vmatpush1.bf16.msra.mxu0 0
    %610 = vmatprep.subr.bf16.mxu0 0
    %611 = vmatpush1.bf16.msra.mxu0 0
    %612 = vmatprep.subr.bf16.mxu0 0
    %613 = vmatpush1.bf16.msra.mxu0 0
    %614 = vmatprep.subr.bf16.mxu0 0
    %615 = vmatpush1.bf16.msra.mxu0 0
    %616 = vmatprep.subr.bf16.mxu0 0
    %617 = vmatpush1.bf16.msra.mxu0 0
    %618 = vmatprep.mubr.bf16.mxu0 0
    %619 = vmatmul.mubr.bf16.gmra.mrb[0].mxu0 %v528
    %v620 = vpop.f32.mrb[0].mxu0
    %v621 = vadd.f32 %v431, %v620
    %v622 = vpop.f32.mrb[0].mxu0
    %v623 = vpop.f32.mrb[0].mxu0
    %v624 = vpop.f32.mrb[0].mxu0
    %625 = vdwg.mxu0
    %v627 = vrot.slane %v621, 6
    %v629 = vmul.f32 %v577, %v627
    %v630 = vadd.f32 %v255, %v629
    %v631 = vtanh.pop %v630
    %v632 = vsub.f32 1.0, %v585
    %v633 = vmul.f32 %v632, %v631
    %v635 = vrot.slane %v527, 6
    %v637 = vmul.f32 %v585, %v635
    %v638 = vadd.f32 %v633, %v637
    %v639 = vpack.c.bf16 %v638, %v638
    %v641 = vrot.slane %v639, 1
    %643 = vmatprep.subr.bf16.mxu0 %v329
    %644 = vmatpush1.bf16.msra.mxu0 %v328
    %645 = vmatprep.subr.bf16.mxu0 %v331
    %646 = vmatpush1.bf16.msra.mxu0 %v330
    %647 = vmatprep.subr.bf16.mxu0 %v333
    %648 = vmatpush1.bf16.msra.mxu0 %v332
    %649 = vmatprep.subr.bf16.mxu0 %v335
    %650 = vmatpush1.bf16.msra.mxu0 %v334
    %651 = vmatprep.subr.bf16.mxu0 %v337
    %652 = vmatpush1.bf16.msra.mxu0 %v336
    %653 = vmatprep.subr.bf16.mxu0 %v339
    %654 = vmatpush1.bf16.msra.mxu0 %v338
    %655 = vmatprep.subr.bf16.mxu0 %v341
    %656 = vmatpush1.bf16.msra.mxu0 %v340
    %657 = vmatprep.subr.bf16.mxu0 %v343
    %658 = vmatpush1.bf16.msra.mxu0 %v342
    %659 = vmatprep.subr.bf16.mxu0 0
    %660 = vmatpush1.bf16.msra.mxu0 0
    %661 = vmatprep.subr.bf16.mxu0 0
    %662 = vmatpush1.bf16.msra.mxu0 0
    %663 = vmatprep.subr.bf16.mxu0 0
    %664 = vmatpush1.bf16.msra.mxu0 0
    %665 = vmatprep.subr.bf16.mxu0 0
    %666 = vmatpush1.bf16.msra.mxu0 0
    %667 = vmatprep.subr.bf16.mxu0 0
    %668 = vmatpush1.bf16.msra.mxu0 0
    %669 = vmatprep.subr.bf16.mxu0 0
    %670 = vmatpush1.bf16.msra.mxu0 0
    %671 = vmatprep.subr.bf16.mxu0 0
    %672 = vmatpush1.bf16.msra.mxu0 0
    %673 = vmatprep.subr.bf16.mxu0 0
    %674 = vmatpush1.bf16.msra.mxu0 0
    %675 = vmatprep.mubr.bf16.mxu0 0
    %676 = vmatmul.mubr.bf16.gmra.mrb[0].mxu0 %v641
    %v677 = vpop.f32.mrb[0].mxu0
    %v678 = vadd.f32 0.0, %v677
    %v679 = vpop.f32.mrb[0].mxu0
    %v680 = vadd.f32 0.0, %v679
    %v681 = vpop.f32.mrb[0].mxu0
    %v682 = vpop.f32.mrb[0].mxu0
    %683 = vdwg.mxu0
    %v685 = vrot.slane %v678, 4
    %v687 = vadd.f32 %v178, %v685
    %v688 = vmul.f32 %v687, 0.5
    %v689 = vtanh.pop %v688
    %v690 = vmul.f32 %v689, 0.5
    %v691 = vadd.f32 %v690, 0.5
    %v693 = vrot.slane %v680, 4
    %v695 = vadd.f32 %v180, %v693
    %v696 = vmul.f32 %v695, 0.5
    %v697 = vtanh.pop %v696
    %v698 = vmul.f32 %v697, 0.5
    %v699 = vadd.f32 %v698, 0.5
    %700 = vmatprep.subr.bf16.mxu0 0
    %701 = vmatpush1.bf16.msra.mxu0 %v465
    %702 = vmatprep.subr.bf16.mxu0 0
    %703 = vmatpush1.bf16.msra.mxu0 %v466
    %704 = vmatprep.subr.bf16.mxu0 0
    %705 = vmatpush1.bf16.msra.mxu0 %v467
    %706 = vmatprep.subr.bf16.mxu0 0
    %707 = vmatpush1.bf16.msra.mxu0 %v468
    %708 = vmatprep.subr.bf16.mxu0 0
    %709 = vmatpush1.bf16.msra.mxu0 %v469
    %710 = vmatprep.subr.bf16.mxu0 0
    %711 = vmatpush1.bf16.msra.mxu0 %v470
    %712 = vmatprep.subr.bf16.mxu0 0
    %713 = vmatpush1.bf16.msra.mxu0 %v471
    %714 = vmatprep.subr.bf16.mxu0 0
    %715 = vmatpush1.bf16.msra.mxu0 %v472
    %716 = vmatprep.subr.bf16.mxu0 0
    %717 = vmatpush1.bf16.msra.mxu0 0
    %718 = vmatprep.subr.bf16.mxu0 0
    %719 = vmatpush1.bf16.msra.mxu0 0
    %720 = vmatprep.subr.bf16.mxu0 0
    %721 = vmatpush1.bf16.msra.mxu0 0
    %722 = vmatprep.subr.bf16.mxu0 0
    %723 = vmatpush1.bf16.msra.mxu0 0
    %724 = vmatprep.subr.bf16.mxu0 0
    %725 = vmatpush1.bf16.msra.mxu0 0
    %726 = vmatprep.subr.bf16.mxu0 0
    %727 = vmatpush1.bf16.msra.mxu0 0
    %728 = vmatprep.subr.bf16.mxu0 0
    %729 = vmatpush1.bf16.msra.mxu0 0
    %730 = vmatprep.subr.bf16.mxu0 0
    %731 = vmatpush1.bf16.msra.mxu0 0
    %732 = vmatprep.mubr.bf16.mxu0 0
    %733 = vmatmul.mubr.bf16.gmra.mrb[0].mxu0 %v641
    %v734 = vpop.f32.mrb[0].mxu0
    %v735 = vadd.f32 %v431, %v734
    %v736 = vpop.f32.mrb[0].mxu0
    %v737 = vpop.f32.mrb[0].mxu0
    %v738 = vpop.f32.mrb[0].mxu0
    %739 = vdwg.mxu0
    %v741 = vrot.slane %v735, 4
    %v743 = vmul.f32 %v691, %v741
    %v744 = vadd.f32 %v255, %v743
    %v745 = vtanh.pop %v744
    %v746 = vsub.f32 1.0, %v699
    %v747 = vmul.f32 %v746, %v745
    %v749 = vrot.slane %v638, 6
    %v751 = vmul.f32 %v699, %v749
    %v752 = vadd.f32 %v747, %v751
    %v753 = vpack.c.bf16 %v752, %v752
    %v755 = vrot.slane %v753, 2
    %757 = vmatprep.subr.bf16.mxu0 %v329
    %758 = vmatpush1.bf16.msra.mxu0 %v328
    %759 = vmatprep.subr.bf16.mxu0 %v331
    %760 = vmatpush1.bf16.msra.mxu0 %v330
    %761 = vmatprep.subr.bf16.mxu0 %v333
    %762 = vmatpush1.bf16.msra.mxu0 %v332
    %763 = vmatprep.subr.bf16.mxu0 %v335
    %764 = vmatpush1.bf16.msra.mxu0 %v334
    %765 = vmatprep.subr.bf16.mxu0 %v337
    %766 = vmatpush1.bf16.msra.mxu0 %v336
    %767 = vmatprep.subr.bf16.mxu0 %v339
    %768 = vmatpush1.bf16.msra.mxu0 %v338
    %769 = vmatprep.subr.bf16.mxu0 %v341
    %770 = vmatpush1.bf16.msra.mxu0 %v340
    %771 = vmatprep.subr.bf16.mxu0 %v343
    %772 = vmatpush1.bf16.msra.mxu0 %v342
    %773 = vmatprep.subr.bf16.mxu0 0
    %774 = vmatpush1.bf16.msra.mxu0 0
    %775 = vmatprep.subr.bf16.mxu0 0
    %776 = vmatpush1.bf16.msra.mxu0 0
    %777 = vmatprep.subr.bf16.mxu0 0
    %778 = vmatpush1.bf16.msra.mxu0 0
    %779 = vmatprep.subr.bf16.mxu0 0
    %780 = vmatpush1.bf16.msra.mxu0 0
    %781 = vmatprep.subr.bf16.mxu0 0
    %782 = vmatpush1.bf16.msra.mxu0 0
    %783 = vmatprep.subr.bf16.mxu0 0
    %784 = vmatpush1.bf16.msra.mxu0 0
    %785 = vmatprep.subr.bf16.mxu0 0
    %786 = vmatpush1.bf16.msra.mxu0 0
    %787 = vmatprep.subr.bf16.mxu0 0
    %788 = vmatpush1.bf16.msra.mxu0 0
    %789 = vmatprep.mubr.bf16.mxu0 0
    %790 = vmatmul.mubr.bf16.gmra.mrb[0].mxu0 %v755
    %v791 = vpop.f32.mrb[0].mxu0
    %v792 = vadd.f32 0.0, %v791
    %v793 = vpop.f32.mrb[0].mxu0
    %v794 = vadd.f32 0.0, %v793
    %v795 = vpop.f32.mrb[0].mxu0
    %v796 = vpop.f32.mrb[0].mxu0
    %797 = vdwg.mxu0
    %v799 = vrot.slane %v792, 2
    %v801 = vadd.f32 %v178, %v799
    %v802 = vmul.f32 %v801, 0.5
    %v803 = vtanh.pop %v802
    %v804 = vmul.f32 %v803, 0.5
    %v805 = vadd.f32 %v804, 0.5
    %v807 = vrot.slane %v794, 2
    %v809 = vadd.f32 %v180, %v807
    %v810 = vmul.f32 %v809, 0.5
    %v811 = vtanh.pop %v810
    %v812 = vmul.f32 %v811, 0.5
    %v813 = vadd.f32 %v812, 0.5
    %814 = vmatprep.subr.bf16.mxu0 0
    %815 = vmatpush1.bf16.msra.mxu0 %v465
    %816 = vmatprep.subr.bf16.mxu0 0
    %817 = vmatpush1.bf16.msra.mxu0 %v466
    %818 = vmatprep.subr.bf16.mxu0 0
    %819 = vmatpush1.bf16.msra.mxu0 %v467
    %820 = vmatprep.subr.bf16.mxu0 0
    %821 = vmatpush1.bf16.msra.mxu0 %v468
    %822 = vmatprep.subr.bf16.mxu0 0
    %823 = vmatpush1.bf16.msra.mxu0 %v469
    %824 = vmatprep.subr.bf16.mxu0 0
    %825 = vmatpush1.bf16.msra.mxu0 %v470
    %826 = vmatprep.subr.bf16.mxu0 0
    %827 = vmatpush1.bf16.msra.mxu0 %v471
    %828 = vmatprep.subr.bf16.mxu0 0
    %829 = vmatpush1.bf16.msra.mxu0 %v472
    %830 = vmatprep.subr.bf16.mxu0 0
    %831 = vmatpush1.bf16.msra.mxu0 0
    %832 = vmatprep.subr.bf16.mxu0 0
    %833 = vmatpush1.bf16.msra.mxu0 0
    %834 = vmatprep.subr.bf16.mxu0 0
    %835 = vmatpush1.bf16.msra.mxu0 0
    %836 = vmatprep.subr.bf16.mxu0 0
    %837 = vmatpush1.bf16.msra.mxu0 0
    %838 = vmatprep.subr.bf16.mxu0 0
    %839 = vmatpush1.bf16.msra.mxu0 0
    %840 = vmatprep.subr.bf16.mxu0 0
    %841 = vmatpush1.bf16.msra.mxu0 0
    %842 = vmatprep.subr.bf16.mxu0 0
    %843 = vmatpush1.bf16.msra.mxu0 0
    %844 = vmatprep.subr.bf16.mxu0 0
    %845 = vmatpush1.bf16.msra.mxu0 0
    %846 = vmatprep.mubr.bf16.mxu0 0
    %847 = vmatmul.mubr.bf16.gmra.mrb[0].mxu0 %v755
    %v848 = vpop.f32.mrb[0].mxu0
    %v849 = vadd.f32 %v431, %v848
    %v850 = vpop.f32.mrb[0].mxu0
    %v851 = vpop.f32.mrb[0].mxu0
    %v852 = vpop.f32.mrb[0].mxu0
    %853 = vdwg.mxu0
    %v855 = vrot.slane %v849, 2
    %v857 = vmul.f32 %v805, %v855
    %v858 = vadd.f32 %v255, %v857
    %v859 = vtanh.pop %v858
    %v860 = vsub.f32 1.0, %v813
    %v861 = vmul.f32 %v860, %v859
    %v863 = vrot.slane %v752, 6
    %v865 = vmul.f32 %v813, %v863
    %v866 = vadd.f32 %v861, %v865
    %v867 = vpack.c.bf16 %v866, %v866
    %v869 = vrot.slane %v867, 3
    %871 = vmatprep.subr.bf16.mxu0 %v329
    %872 = vmatpush1.bf16.msra.mxu0 %v328
    %873 = vmatprep.subr.bf16.mxu0 %v331
    %874 = vmatpush1.bf16.msra.mxu0 %v330
    %875 = vmatprep.subr.bf16.mxu0 %v333
    %876 = vmatpush1.bf16.msra.mxu0 %v332
    %877 = vmatprep.subr.bf16.mxu0 %v335
    %878 = vmatpush1.bf16.msra.mxu0 %v334
    %879 = vmatprep.subr.bf16.mxu0 %v337
    %880 = vmatpush1.bf16.msra.mxu0 %v336
    %881 = vmatprep.subr.bf16.mxu0 %v339
    %882 = vmatpush1.bf16.msra.mxu0 %v338
    %883 = vmatprep.subr.bf16.mxu0 %v341
    %884 = vmatpush1.bf16.msra.mxu0 %v340
    %885 = vmatprep.subr.bf16.mxu0 %v343
    %886 = vmatpush1.bf16.msra.mxu0 %v342
    %887 = vmatprep.subr.bf16.mxu0 0
    %888 = vmatpush1.bf16.msra.mxu0 0
    %889 = vmatprep.subr.bf16.mxu0 0
    %890 = vmatpush1.bf16.msra.mxu0 0
    %891 = vmatprep.subr.bf16.mxu0 0
    %892 = vmatpush1.bf16.msra.mxu0 0
    %893 = vmatprep.subr.bf16.mxu0 0
    %894 = vmatpush1.bf16.msra.mxu0 0
    %895 = vmatprep.subr.bf16.mxu0 0
    %896 = vmatpush1.bf16.msra.mxu0 0
    %897 = vmatprep.subr.bf16.mxu0 0
    %898 = vmatpush1.bf16.msra.mxu0 0
    %899 = vmatprep.subr.bf16.mxu0 0
    %900 = vmatpush1.bf16.msra.mxu0 0
    %901 = vmatprep.subr.bf16.mxu0 0
    %902 = vmatpush1.bf16.msra.mxu0 0
    %903 = vmatprep.mubr.bf16.mxu0 0
    %904 = vmatmul.mubr.bf16.gmra.mrb[0].mxu0 %v869
    %v905 = vpop.f32.mrb[0].mxu0
    %v906 = vadd.f32 0.0, %v905
    %v907 = vpop.f32.mrb[0].mxu0
    %v908 = vadd.f32 0.0, %v907
    %v909 = vpop.f32.mrb[0].mxu0
    %v910 = vpop.f32.mrb[0].mxu0
    %911 = vdwg.mxu0
    %v912 = vadd.f32 %v184, %v906
    %v913 = vmul.f32 %v912, 0.5
    %v914 = vtanh.pop %v913
    %v915 = vmul.f32 %v914, 0.5
    %v916 = vadd.f32 %v915, 0.5
    %v917 = vadd.f32 %v186, %v908
    %v918 = vmul.f32 %v917, 0.5
    %v919 = vtanh.pop %v918
    %v920 = vmul.f32 %v919, 0.5
    %v921 = vadd.f32 %v920, 0.5
    %922 = vmatprep.subr.bf16.mxu0 0
    %923 = vmatpush1.bf16.msra.mxu0 %v465
    %924 = vmatprep.subr.bf16.mxu0 0
    %925 = vmatpush1.bf16.msra.mxu0 %v466
    %926 = vmatprep.subr.bf16.mxu0 0
    %927 = vmatpush1.bf16.msra.mxu0 %v467
    %928 = vmatprep.subr.bf16.mxu0 0
    %929 = vmatpush1.bf16.msra.mxu0 %v468
    %930 = vmatprep.subr.bf16.mxu0 0
    %931 = vmatpush1.bf16.msra.mxu0 %v469
    %932 = vmatprep.subr.bf16.mxu0 0
    %933 = vmatpush1.bf16.msra.mxu0 %v470
    %934 = vmatprep.subr.bf16.mxu0 0
    %935 = vmatpush1.bf16.msra.mxu0 %v471
    %936 = vmatprep.subr.bf16.mxu0 0
    %937 = vmatpush1.bf16.msra.mxu0 %v472
    %938 = vmatprep.subr.bf16.mxu0 0
    %939 = vmatpush1.bf16.msra.mxu0 0
    %940 = vmatprep.subr.bf16.mxu0 0
    %941 = vmatpush1.bf16.msra.mxu0 0
    %942 = vmatprep.subr.bf16.mxu0 0
    %943 = vmatpush1.bf16.msra.mxu0 0
    %944 = vmatprep.subr.bf16.mxu0 0
    %945 = vmatpush1.bf16.msra.mxu0 0
    %946 = vmatprep.subr.bf16.mxu0 0
    %947 = vmatpush1.bf16.msra.mxu0 0
    %948 = vmatprep.subr.bf16.mxu0 0
    %949 = vmatpush1.bf16.msra.mxu0 0
    %950 = vmatprep.subr.bf16.mxu0 0
    %951 = vmatpush1.bf16.msra.mxu0 0
    %952 = vmatprep.subr.bf16.mxu0 0
    %953 = vmatpush1.bf16.msra.mxu0 0
    %954 = vmatprep.mubr.bf16.mxu0 0
    %955 = vmatmul.mubr.bf16.gmra.mrb[0].mxu0 %v869
    %v956 = vpop.f32.mrb[0].mxu0
    %v957 = vadd.f32 %v431, %v956
    %v958 = vpop.f32.mrb[0].mxu0
    %v959 = vpop.f32.mrb[0].mxu0
    %v960 = vpop.f32.mrb[0].mxu0
    %961 = vdwg.mxu0
    %v962 = vmul.f32 %v916, %v957
    %v963 = vadd.f32 %v260, %v962
    %v964 = vtanh.pop %v963
    %v965 = vsub.f32 1.0, %v921
    %v966 = vmul.f32 %v965, %v964
    %v968 = vrot.slane %v866, 6
    %v970 = vmul.f32 %v921, %v968
    %v971 = vadd.f32 %v966, %v970
    %v972 = vpack.c.bf16 %v971, %v971
    %973 = vmatprep.subr.bf16.mxu0 %v329
    %974 = vmatpush1.bf16.msra.mxu0 %v328
    %975 = vmatprep.subr.bf16.mxu0 %v331
    %976 = vmatpush1.bf16.msra.mxu0 %v330
    %977 = vmatprep.subr.bf16.mxu0 %v333
    %978 = vmatpush1.bf16.msra.mxu0 %v332
    %979 = vmatprep.subr.bf16.mxu0 %v335
    %980 = vmatpush1.bf16.msra.mxu0 %v334
    %981 = vmatprep.subr.bf16.mxu0 %v337
    %982 = vmatpush1.bf16.msra.mxu0 %v336
    %983 = vmatprep.subr.bf16.mxu0 %v339
    %984 = vmatpush1.bf16.msra.mxu0 %v338
    %985 = vmatprep.subr.bf16.mxu0 %v341
    %986 = vmatpush1.bf16.msra.mxu0 %v340
    %987 = vmatprep.subr.bf16.mxu0 %v343
    %988 = vmatpush1.bf16.msra.mxu0 %v342
    %989 = vmatprep.subr.bf16.mxu0 0
    %990 = vmatpush1.bf16.msra.mxu0 0
    %991 = vmatprep.subr.bf16.mxu0 0
    %992 = vmatpush1.bf16.msra.mxu0 0
    %993 = vmatprep.subr.bf16.mxu0 0
    %994 = vmatpush1.bf16.msra.mxu0 0
    %995 = vmatprep.subr.bf16.mxu0 0
    %996 = vmatpush1.bf16.msra.mxu0 0
    %997 = vmatprep.subr.bf16.mxu0 0
    %998 = vmatpush1.bf16.msra.mxu0 0
    %999 = vmatprep.subr.bf16.mxu0 0
    %1000 = vmatpush1.bf16.msra.mxu0 0
    %1001 = vmatprep.subr.bf16.mxu0 0
    %1002 = vmatpush1.bf16.msra.mxu0 0
    %1003 = vmatprep.subr.bf16.mxu0 0
    %1004 = vmatpush1.bf16.msra.mxu0 0
    %1005 = vmatprep.mubr.bf16.mxu0 0
    %1006 = vmatmul.mubr.bf16.gmra.mrb[0].mxu0 %v972
    %v1007 = vpop.f32.mrb[0].mxu0
    %v1008 = vadd.f32 0.0, %v1007
    %v1009 = vpop.f32.mrb[0].mxu0
    %v1010 = vadd.f32 0.0, %v1009
    %v1011 = vpop.f32.mrb[0].mxu0
    %v1012 = vpop.f32.mrb[0].mxu0
    %1013 = vdwg.mxu0
    %v1015 = vrot.slane %v1008, 6
    %v1017 = vadd.f32 %v184, %v1015
    %v1018 = vmul.f32 %v1017, 0.5
    %v1019 = vtanh.pop %v1018
    %v1020 = vmul.f32 %v1019, 0.5
    %v1021 = vadd.f32 %v1020, 0.5
    %v1023 = vrot.slane %v1010, 6
    %v1025 = vadd.f32 %v186, %v1023
    %v1026 = vmul.f32 %v1025, 0.5
    %v1027 = vtanh.pop %v1026
    %v1028 = vmul.f32 %v1027, 0.5
    %v1029 = vadd.f32 %v1028, 0.5
    %1030 = vmatprep.subr.bf16.mxu0 0
    %1031 = vmatpush1.bf16.msra.mxu0 %v465
    %1032 = vmatprep.subr.bf16.mxu0 0
    %1033 = vmatpush1.bf16.msra.mxu0 %v466
    %1034 = vmatprep.subr.bf16.mxu0 0
    %1035 = vmatpush1.bf16.msra.mxu0 %v467
    %1036 = vmatprep.subr.bf16.mxu0 0
    %1037 = vmatpush1.bf16.msra.mxu0 %v468
    %1038 = vmatprep.subr.bf16.mxu0 0
    %1039 = vmatpush1.bf16.msra.mxu0 %v469
    %1040 = vmatprep.subr.bf16.mxu0 0
    %1041 = vmatpush1.bf16.msra.mxu0 %v470
    %1042 = vmatprep.subr.bf16.mxu0 0
    %1043 = vmatpush1.bf16.msra.mxu0 %v471
    %1044 = vmatprep.subr.bf16.mxu0 0
    %1045 = vmatpush1.bf16.msra.mxu0 %v472
    %1046 = vmatprep.subr.bf16.mxu0 0
    %1047 = vmatpush1.bf16.msra.mxu0 0
    %1048 = vmatprep.subr.bf16.mxu0 0
    %1049 = vmatpush1.bf16.msra.mxu0 0
    %1050 = vmatprep.subr.bf16.mxu0 0
    %1051 = vmatpush1.bf16.msra.mxu0 0
    %1052 = vmatprep.subr.bf16.mxu0 0
    %1053 = vmatpush1.bf16.msra.mxu0 0
    %1054 = vmatprep.subr.bf16.mxu0 0
    %1055 = vmatpush1.bf16.msra.mxu0 0
    %1056 = vmatprep.subr.bf16.mxu0 0
    %1057 = vmatpush1.bf16.msra.mxu0 0
    %1058 = vmatprep.subr.bf16.mxu0 0
    %1059 = vmatpush1.bf16.msra.mxu0 0
    %1060 = vmatprep.subr.bf16.mxu0 0
    %1061 = vmatpush1.bf16.msra.mxu0 0
    %1062 = vmatprep.mubr.bf16.mxu0 0
    %1063 = vmatmul.mubr.bf16.gmra.mrb[0].mxu0 %v972
    %v1064 = vpop.f32.mrb[0].mxu0
    %v1065 = vadd.f32 %v431, %v1064
    %v1066 = vpop.f32.mrb[0].mxu0
    %v1067 = vpop.f32.mrb[0].mxu0
    %v1068 = vpop.f32.mrb[0].mxu0
    %1069 = vdwg.mxu0
    %v1071 = vrot.slane %v1065, 6
    %v1073 = vmul.f32 %v1021, %v1071
    %v1074 = vadd.f32 %v260, %v1073
    %v1075 = vtanh.pop %v1074
    %v1076 = vsub.f32 1.0, %v1029
    %v1077 = vmul.f32 %v1076, %v1075
    %v1079 = vrot.slane %v971, 6
    %v1081 = vmul.f32 %v1029, %v1079
    %v1082 = vadd.f32 %v1077, %v1081
    %v1083 = vpack.c.bf16 %v1082, %v1082
    %v1085 = vrot.slane %v1083, 1
    %1087 = vmatprep.subr.bf16.mxu0 %v329
    %1088 = vmatpush1.bf16.msra.mxu0 %v328
    %1089 = vmatprep.subr.bf16.mxu0 %v331
    %1090 = vmatpush1.bf16.msra.mxu0 %v330
    %1091 = vmatprep.subr.bf16.mxu0 %v333
    %1092 = vmatpush1.bf16.msra.mxu0 %v332
    %1093 = vmatprep.subr.bf16.mxu0 %v335
    %1094 = vmatpush1.bf16.msra.mxu0 %v334
    %1095 = vmatprep.subr.bf16.mxu0 %v337
    %1096 = vmatpush1.bf16.msra.mxu0 %v336
    %1097 = vmatprep.subr.bf16.mxu0 %v339
    %1098 = vmatpush1.bf16.msra.mxu0 %v338
    %1099 = vmatprep.subr.bf16.mxu0 %v341
    %1100 = vmatpush1.bf16.msra.mxu0 %v340
    %1101 = vmatprep.subr.bf16.mxu0 %v343
    %1102 = vmatpush1.bf16.msra.mxu0 %v342
    %1103 = vmatprep.subr.bf16.mxu0 0
    %1104 = vmatpush1.bf16.msra.mxu0 0
    %1105 = vmatprep.subr.bf16.mxu0 0
    %1106 = vmatpush1.bf16.msra.mxu0 0
    %1107 = vmatprep.subr.bf16.mxu0 0
    %1108 = vmatpush1.bf16.msra.mxu0 0
    %1109 = vmatprep.subr.bf16.mxu0 0
    %1110 = vmatpush1.bf16.msra.mxu0 0
    %1111 = vmatprep.subr.bf16.mxu0 0
    %1112 = vmatpush1.bf16.msra.mxu0 0
    %1113 = vmatprep.subr.bf16.mxu0 0
    %1114 = vmatpush1.bf16.msra.mxu0 0
    %1115 = vmatprep.subr.bf16.mxu0 0
    %1116 = vmatpush1.bf16.msra.mxu0 0
    %1117 = vmatprep.subr.bf16.mxu0 0
    %1118 = vmatpush1.bf16.msra.mxu0 0
    %1119 = vmatprep.mubr.bf16.mxu0 0
    %1120 = vmatmul.mubr.bf16.gmra.mrb[0].mxu0 %v1085
    %v1121 = vpop.f32.mrb[0].mxu0
    %v1122 = vadd.f32 0.0, %v1121
    %v1123 = vpop.f32.mrb[0].mxu0
    %v1124 = vadd.f32 0.0, %v1123
    %v1125 = vpop.f32.mrb[0].mxu0
    %v1126 = vpop.f32.mrb[0].mxu0
    %1127 = vdwg.mxu0
    %v1129 = vrot.slane %v1122, 4
    %v1131 = vadd.f32 %v184, %v1129
    %v1132 = vmul.f32 %v1131, 0.5
    %v1133 = vtanh.pop %v1132
    %v1134 = vmul.f32 %v1133, 0.5
    %v1135 = vadd.f32 %v1134, 0.5
    %v1137 = vrot.slane %v1124, 4
    %v1139 = vadd.f32 %v186, %v1137
    %v1140 = vmul.f32 %v1139, 0.5
    %v1141 = vtanh.pop %v1140
    %v1142 = vmul.f32 %v1141, 0.5
    %v1143 = vadd.f32 %v1142, 0.5
    %1144 = vmatprep.subr.bf16.mxu0 0
    %1145 = vmatpush1.bf16.msra.mxu0 %v465
    %1146 = vmatprep.subr.bf16.mxu0 0
    %1147 = vmatpush1.bf16.msra.mxu0 %v466
    %1148 = vmatprep.subr.bf16.mxu0 0
    %1149 = vmatpush1.bf16.msra.mxu0 %v467
    %1150 = vmatprep.subr.bf16.mxu0 0
    %1151 = vmatpush1.bf16.msra.mxu0 %v468
    %1152 = vmatprep.subr.bf16.mxu0 0
    %1153 = vmatpush1.bf16.msra.mxu0 %v469
    %1154 = vmatprep.subr.bf16.mxu0 0
    %1155 = vmatpush1.bf16.msra.mxu0 %v470
    %1156 = vmatprep.subr.bf16.mxu0 0
    %1157 = vmatpush1.bf16.msra.mxu0 %v471
    %1158 = vmatprep.subr.bf16.mxu0 0
    %1159 = vmatpush1.bf16.msra.mxu0 %v472
    %1160 = vmatprep.subr.bf16.mxu0 0
    %1161 = vmatpush1.bf16.msra.mxu0 0
    %1162 = vmatprep.subr.bf16.mxu0 0
    %1163 = vmatpush1.bf16.msra.mxu0 0
    %1164 = vmatprep.subr.bf16.mxu0 0
    %1165 = vmatpush1.bf16.msra.mxu0 0
    %1166 = vmatprep.subr.bf16.mxu0 0
    %1167 = vmatpush1.bf16.msra.mxu0 0
    %1168 = vmatprep.subr.bf16.mxu0 0
    %1169 = vmatpush1.bf16.msra.mxu0 0
    %1170 = vmatprep.subr.bf16.mxu0 0
    %1171 = vmatpush1.bf16.msra.mxu0 0
    %1172 = vmatprep.subr.bf16.mxu0 0
    %1173 = vmatpush1.bf16.msra.mxu0 0
    %1174 = vmatprep.subr.bf16.mxu0 0
    %1175 = vmatpush1.bf16.msra.mxu0 0
    %1176 = vmatprep.mubr.bf16.mxu0 0
    %1177 = vmatmul.mubr.bf16.gmra.mrb[0].mxu0 %v1085
    %v1178 = vpop.f32.mrb[0].mxu0
    %v1179 = vadd.f32 %v431, %v1178
    %v1180 = vpop.f32.mrb[0].mxu0
    %v1181 = vpop.f32.mrb[0].mxu0
    %v1182 = vpop.f32.mrb[0].mxu0
    %1183 = vdwg.mxu0
    %v1185 = vrot.slane %v1179, 4
    %v1187 = vmul.f32 %v1135, %v1185
    %v1188 = vadd.f32 %v260, %v1187
    %v1189 = vtanh.pop %v1188
    %v1190 = vsub.f32 1.0, %v1143
    %v1191 = vmul.f32 %v1190, %v1189
    %v1193 = vrot.slane %v1082, 6
    %v1195 = vmul.f32 %v1143, %v1193
    %v1196 = vadd.f32 %v1191, %v1195
    %v1197 = vpack.c.bf16 %v1196, %v1196
    %v1199 = vrot.slane %v1197, 2
    %1201 = vmatprep.subr.bf16.mxu0 %v329
    %1202 = vmatpush1.bf16.msra.mxu0 %v328
    %1203 = vmatprep.subr.bf16.mxu0 %v331
    %1204 = vmatpush1.bf16.msra.mxu0 %v330
    %1205 = vmatprep.subr.bf16.mxu0 %v333
    %1206 = vmatpush1.bf16.msra.mxu0 %v332
    %1207 = vmatprep.subr.bf16.mxu0 %v335
    %1208 = vmatpush1.bf16.msra.mxu0 %v334
    %1209 = vmatprep.subr.bf16.mxu0 %v337
    %1210 = vmatpush1.bf16.msra.mxu0 %v336
    %1211 = vmatprep.subr.bf16.mxu0 %v339
    %1212 = vmatpush1.bf16.msra.mxu0 %v338
    %1213 = vmatprep.subr.bf16.mxu0 %v341
    %1214 = vmatpush1.bf16.msra.mxu0 %v340
    %1215 = vmatprep.subr.bf16.mxu0 %v343
    %1216 = vmatpush1.bf16.msra.mxu0 %v342
    %1217 = vmatprep.subr.bf16.mxu0 0
    %1218 = vmatpush1.bf16.msra.mxu0 0
    %1219 = vmatprep.subr.bf16.mxu0 0
    %1220 = vmatpush1.bf16.msra.mxu0 0
    %1221 = vmatprep.subr.bf16.mxu0 0
    %1222 = vmatpush1.bf16.msra.mxu0 0
    %1223 = vmatprep.subr.bf16.mxu0 0
    %1224 = vmatpush1.bf16.msra.mxu0 0
    %1225 = vmatprep.subr.bf16.mxu0 0
    %1226 = vmatpush1.bf16.msra.mxu0 0
    %1227 = vmatprep.subr.bf16.mxu0 0
    %1228 = vmatpush1.bf16.msra.mxu0 0
    %1229 = vmatprep.subr.bf16.mxu0 0
    %1230 = vmatpush1.bf16.msra.mxu0 0
    %1231 = vmatprep.subr.bf16.mxu0 0
    %1232 = vmatpush1.bf16.msra.mxu0 0
    %1233 = vmatprep.mubr.bf16.mxu0 0
    %1234 = vmatmul.mubr.bf16.gmra.mrb[0].mxu0 %v1199
    %v1235 = vpop.f32.mrb[0].mxu0
    %v1236 = vadd.f32 0.0, %v1235
    %v1237 = vpop.f32.mrb[0].mxu0
    %v1238 = vadd.f32 0.0, %v1237
    %v1239 = vpop.f32.mrb[0].mxu0
    %v1240 = vpop.f32.mrb[0].mxu0
    %1241 = vdwg.mxu0
    %v1243 = vrot.slane %v1236, 2
    %v1245 = vadd.f32 %v184, %v1243
    %v1246 = vmul.f32 %v1245, 0.5
    %v1247 = vtanh.pop %v1246
    %v1248 = vmul.f32 %v1247, 0.5
    %v1249 = vadd.f32 %v1248, 0.5
    %v1251 = vrot.slane %v1238, 2
    %v1253 = vadd.f32 %v186, %v1251
    %v1254 = vmul.f32 %v1253, 0.5
    %v1255 = vtanh.pop %v1254
    %v1256 = vmul.f32 %v1255, 0.5
    %v1257 = vadd.f32 %v1256, 0.5
    %1258 = vmatprep.subr.bf16.mxu0 0
    %1259 = vmatpush1.bf16.msra.mxu0 %v465
    %1260 = vmatprep.subr.bf16.mxu0 0
    %1261 = vmatpush1.bf16.msra.mxu0 %v466
    %1262 = vmatprep.subr.bf16.mxu0 0
    %1263 = vmatpush1.bf16.msra.mxu0 %v467
    %1264 = vmatprep.subr.bf16.mxu0 0
    %1265 = vmatpush1.bf16.msra.mxu0 %v468
    %1266 = vmatprep.subr.bf16.mxu0 0
    %1267 = vmatpush1.bf16.msra.mxu0 %v469
    %1268 = vmatprep.subr.bf16.mxu0 0
    %1269 = vmatpush1.bf16.msra.mxu0 %v470
    %1270 = vmatprep.subr.bf16.mxu0 0
    %1271 = vmatpush1.bf16.msra.mxu0 %v471
    %1272 = vmatprep.subr.bf16.mxu0 0
    %1273 = vmatpush1.bf16.msra.mxu0 %v472
    %1274 = vmatprep.subr.bf16.mxu0 0
    %1275 = vmatpush1.bf16.msra.mxu0 0
    %1276 = vmatprep.subr.bf16.mxu0 0
    %1277 = vmatpush1.bf16.msra.mxu0 0
    %1278 = vmatprep.subr.bf16.mxu0 0
    %1279 = vmatpush1.bf16.msra.mxu0 0
    %1280 = vmatprep.subr.bf16.mxu0 0
    %1281 = vmatpush1.bf16.msra.mxu0 0
    %1282 = vmatprep.subr.bf16.mxu0 0
    %1283 = vmatpush1.bf16.msra.mxu0 0
    %1284 = vmatprep.subr.bf16.mxu0 0
    %1285 = vmatpush1.bf16.msra.mxu0 0
    %1286 = vmatprep.subr.bf16.mxu0 0
    %1287 = vmatpush1.bf16.msra.mxu0 0
    %1288 = vmatprep.subr.bf16.mxu0 0
    %1289 = vmatpush1.bf16.msra.mxu0 0
    %1290 = vmatprep.mubr.bf16.mxu0 0
    %1291 = vmatmul.mubr.bf16.gmra.mrb[0].mxu0 %v1199
    %v1292 = vpop.f32.mrb[0].mxu0
    %v1293 = vadd.f32 %v431, %v1292
    %v1294 = vpop.f32.mrb[0].mxu0
    %v1295 = vpop.f32.mrb[0].mxu0
    %v1296 = vpop.f32.mrb[0].mxu0
    %1297 = vdwg.mxu0
    %v1299 = vrot.slane %v1293, 2
    %v1301 = vmul.f32 %v1249, %v1299
    %v1302 = vadd.f32 %v260, %v1301
    %v1303 = vtanh.pop %v1302
    %v1304 = vsub.f32 1.0, %v1257
    %v1305 = vmul.f32 %v1304, %v1303
    %v1307 = vrot.slane %v1196, 6
    %v1309 = vmul.f32 %v1257, %v1307
    %v1310 = vadd.f32 %v1305, %v1309
    %vm1311 = vcmask 1041408
    %v1312 = vsel %vm1311, %v527, %v638
    %vm1313 = vcmask 1043456
    %v1314 = vsel %vm1313, %v1312, %v752
    %vm1315 = vcmask 1045504
    %v1316 = vsel %vm1315, %v1314, %v866
    %v1317 = vsel %vm1311, %v971, %v1082
    %v1318 = vsel %vm1313, %v1317, %v1196
    %v1319 = vsel %vm1315, %v1318, %v1310
    %v1320 = vld [vmem:[%s6] sm:$0xff]
    %v1321 = vld [vmem:[%s6 + $0x8] sm:$0xff]
    %v1322 = vld [vmem:[%s6 + $0x10] sm:$0xff]
    %v1323 = vld [vmem:[%s6 + $0x18] sm:$0xff]
    %v1324 = vld [vmem:[%s6 + $0x20] sm:$0xff]
    %v1325 = vld [vmem:[%s6 + $0x28] sm:$0xff]
    %v1326 = vld [vmem:[%s6 + $0x30] sm:$0xff]
    %v1327 = vld [vmem:[%s6 + $0x38] sm:$0xff]
    %v1328 = vld [vmem:[%s6 + $0x40] sm:$0xff]
    %v1329 = vld [vmem:[%s6 + $0x48] sm:$0xff]
    %v1330 = vld [vmem:[%s6 + $0x50] sm:$0xff]
    %v1331 = vld [vmem:[%s6 + $0x58] sm:$0xff]
    %v1332 = vld [vmem:[%s6 + $0x60] sm:$0xff]
    %v1333 = vld [vmem:[%s6 + $0x68] sm:$0xff]
    %v1334 = vld [vmem:[%s6 + $0x70] sm:$0xff]
    %v1335 = vld [vmem:[%s6 + $0x78] sm:$0xff]
    %v1336 = vld [vmem:[%s7] sm:$0x1]
    %v1338 = vlaneseq
    %v1339 = vshrl.u32 %v1338, 7
    %v1340 = vsub.s32 0, %v1339
    %v1341 = vrot.slane %v1336, %v1340
    %1343 = vmatprep.subr.mxu0 0.0
    %1344 = vmatpush1.msra.mxu0 %v1320
    %1345 = vmatprep.subr.mxu0 0.0
    %1346 = vmatpush1.msra.mxu0 %v1321
    %1347 = vmatprep.subr.mxu0 0.0
    %1348 = vmatpush1.msra.mxu0 %v1322
    %1349 = vmatprep.subr.mxu0 0.0
    %1350 = vmatpush1.msra.mxu0 %v1323
    %1351 = vmatprep.subr.mxu0 0.0
    %1352 = vmatpush1.msra.mxu0 %v1324
    %1353 = vmatprep.subr.mxu0 0.0
    %1354 = vmatpush1.msra.mxu0 %v1325
    %1355 = vmatprep.subr.mxu0 0.0
    %1356 = vmatpush1.msra.mxu0 %v1326
    %1357 = vmatprep.subr.mxu0 0.0
    %1358 = vmatpush1.msra.mxu0 %v1327
    %1359 = vmatprep.subr.mxu0 0.0
    %1360 = vmatpush1.msra.mxu0 %v1328
    %1361 = vmatprep.subr.mxu0 0.0
    %1362 = vmatpush1.msra.mxu0 %v1329
    %1363 = vmatprep.subr.mxu0 0.0
    %1364 = vmatpush1.msra.mxu0 %v1330
    %1365 = vmatprep.subr.mxu0 0.0
    %1366 = vmatpush1.msra.mxu0 %v1331
    %1367 = vmatprep.subr.mxu0 0.0
    %1368 = vmatpush1.msra.mxu0 %v1332
    %1369 = vmatprep.subr.mxu0 0.0
    %1370 = vmatpush1.msra.mxu0 %v1333
    %1371 = vmatprep.subr.mxu0 0.0
    %1372 = vmatpush1.msra.mxu0 %v1334
    %1373 = vmatprep.subr.mxu0 0.0
    %1374 = vmatpush1.msra.mxu0 %v1335
    %1375 = vmatprep.subr.mxu0 0.0
    %1376 = vmatpush1.msra.mxu0 0.0
    %1377 = vmatprep.subr.mxu0 0.0
    %1378 = vmatpush1.msra.mxu0 0.0
    %1379 = vmatprep.subr.mxu0 0.0
    %1380 = vmatpush1.msra.mxu0 0.0
    %1381 = vmatprep.subr.mxu0 0.0
    %1382 = vmatpush1.msra.mxu0 0.0
    %1383 = vmatprep.subr.mxu0 0.0
    %1384 = vmatpush1.msra.mxu0 0.0
    %1385 = vmatprep.subr.mxu0 0.0
    %1386 = vmatpush1.msra.mxu0 0.0
    %1387 = vmatprep.subr.mxu0 0.0
    %1388 = vmatpush1.msra.mxu0 0.0
    %1389 = vmatprep.subr.mxu0 0.0
    %1390 = vmatpush1.msra.mxu0 0.0
    %1391 = vmatprep.subr.mxu0 0.0
    %1392 = vmatpush1.msra.mxu0 0.0
    %1393 = vmatprep.subr.mxu0 0.0
    %1394 = vmatpush1.msra.mxu0 0.0
    %1395 = vmatprep.subr.mxu0 0.0
    %1396 = vmatpush1.msra.mxu0 0.0
    %1397 = vmatprep.subr.mxu0 0.0
    %1398 = vmatpush1.msra.mxu0 0.0
    %1399 = vmatprep.subr.mxu0 0.0
    %1400 = vmatpush1.msra.mxu0 0.0
    %1401 = vmatprep.subr.mxu0 0.0
    %1402 = vmatpush1.msra.mxu0 0.0
    %1403 = vmatprep.subr.mxu0 0.0
    %1404 = vmatpush1.msra.mxu0 0.0
    %1405 = vmatprep.subr.mxu0 0.0
    %1406 = vmatpush1.msra.mxu0 0.0
    %1407 = vmatprep.mubr.f32.mxu0 0.0
    %1408 = vmatmul.mubr.f32.gmra.mrb[0].mxu0 %v1316
    %v1409 = vpop.f32.mrb[0].mxu0
    %v1410 = vadd.f32 %v1341, %v1409
    %v1411 = vpop.f32.mrb[0].mxu0
    %1412 = vmatprep.mubr.f32.mxu0 0.0
    %1413 = vmatmul.mubr.f32.gmra.mrb[0].mxu0 %v1319
    %v1414 = vpop.f32.mrb[0].mxu0
    %v1415 = vadd.f32 %v1341, %v1414
    %v1416 = vpop.f32.mrb[0].mxu0
    %1417 = vdwg.mxu0
    %1418 = vst [vmem:[%s8] sm:$0xff] %v1410
    %1419 = vst [vmem:[%s8 + $0x8] sm:$0xff] %v1415
    // Predicated region
    $region38: #{fwd.1} parent=1 // pred_check
      _
    $region39: #{fwd.1} parent=1 // pred_check_branch
      %1421 = sbr.rel (0) target = $region41
    $region40: #{fwd.1} parent=1 // pred_region
      _
    $region41: #{fwd.1} parent=1 // pred_fallthru
      _
    // Predicated region
    $region42: #{fwd.1} parent=1 // pred_check
      _
    $region43: #{fwd.1} parent=1 // pred_check_branch
      %1423 = sbr.rel (0) target = $region45
    $region44: #{fwd.1} parent=1 // pred_region
      _
    $region45: #{fwd.1} parent=1 // pred_fallthru
      _
    %1424 = vsyncpa [#allocation3], 1

</llo_original>
